<compile_context>
chip_gen: v5e
topology: v5e:2x2
jax: 0.10.0
libtpu: 0.0.40
codegen_flags: <defaults>
</compile_context>

<pallas_src>
import functools

import jax
import jax.numpy as jnp
from jax.experimental import pallas as pl
from jax.experimental.pallas import tpu as pltpu

# ----------------------------- config (small, synthetic) -----------------------------
B = 2                # batch
S = 8                # seq_len
H = 32               # hidden_size
NH = 4               # num_attention_heads
NKV = 2              # num_key_value_heads
D = 16               # head_dim
E = 4                # num_experts
TOP_K = 2            # num_experts_per_tok
I = 64               # moe_intermediate_size
EPS = 1e-6           # rms_norm_eps
THETA = 10000.0      # rope_theta
NORM_TOPK_PROB = True
T = B * S            # tokens
GROUP = NH // NKV    # GQA group size
NQKV = NH * D + 2 * NKV * D   # fused QKV projection width (= 128, lane-dense)
QW = NH * D          # 64
KW = NKV * D         # 32


# ----------------------------- Pallas kernels -----------------------------
def _attn_block_kernel(h_ref, mask_ref, inw_ref, wqkv_ref, qw_ref, kw_ref,
                       cos_ref, sin_ref, g_ref, rot_ref, wo_ref, pw_ref, wr_ref,
                       slab_ref, kv_ref, *, eps, scale):
    """Fused: input RMSNorm -> QKV -> batched q/k RMSNorm+RoPE -> SDPA -> O-proj +
    residual -> post-attention RMSNorm + router logits.  One grid step (whole batch)."""
    x = h_ref[...]                                               # (T, H) f32 residual
    var = jnp.mean(x * x, axis=-1, keepdims=True)
    xn = x * jax.lax.rsqrt(var + eps) * inw_ref[...]             # input_layernorm
    qkv = jnp.dot(xn.astype(jnp.bfloat16), wqkv_ref[...],
                  preferred_element_type=jnp.float32)            # (T, 128)

    q = qkv[:, :QW]                                              # (T, NH*D)
    k = qkv[:, QW:QW + KW]                                       # (T, NKV*D)
    v = qkv[:, QW + KW:]                                         # (T, NKV*D)

    cos_q = cos_ref[...]                                         # (T, NH*D)
    sin_q = sin_ref[...]

    def norm_rope(t, w_t, width):
        # per-head RMSNorm: block-diag (1/D) matrix broadcasts each head's mean(sq)
        ms = jnp.dot(t * t, g_ref[:width, :width], preferred_element_type=jnp.float32)
        tn = t * jax.lax.rsqrt(ms + eps) * w_t
        # rotate_half for all heads at once via a block-diag rotation matrix
        tr = jnp.dot(tn, rot_ref[:width, :width], preferred_element_type=jnp.float32)
        return tn * cos_q[:, :width] + tr * sin_q[:, :width]

    q_r = norm_rope(q, qw_ref[...], QW)
    k_r = norm_rope(k, kw_ref[...], KW)

    kv_ref[...] = jnp.concatenate([k_r, v], axis=-1)             # fused present [K|V]

    mask = mask_ref[...]                                         # (T, T) block-diag mask
    ctxs = []
    for h in range(NH):                                          # NH=4, tiny; unrolled
        qh = q_r[:, h * D:(h + 1) * D]
        g_i = h // GROUP
        kh = k_r[:, g_i * D:(g_i + 1) * D]
        vh = v[:, g_i * D:(g_i + 1) * D]
        s = jax.lax.dot_general(qh, kh, (((1,), (1,)), ((), ())),
                                preferred_element_type=jnp.float32) * scale + mask
        m = jnp.max(s, axis=-1, keepdims=True)
        p = jnp.exp(s - m)
        p = p * pl.reciprocal(jnp.sum(p, axis=-1, keepdims=True), approx=True)
        ctxs.append(jnp.dot(p, vh, preferred_element_type=jnp.float32))
    ctx = jnp.concatenate(ctxs, axis=-1)                          # (T, NH*D)

    attn = x + jnp.dot(ctx.astype(jnp.bfloat16), wo_ref[...],
                       preferred_element_type=jnp.float32)        # single O-proj matmul

    # --- fused epilogue: post_attention_layernorm + router logits ---
    var2 = jnp.mean(attn * attn, axis=-1, keepdims=True)
    xn2 = attn * jax.lax.rsqrt(var2 + eps) * pw_ref[...]
    logits = jnp.dot(xn2, wr_ref[...], preferred_element_type=jnp.float32)  # (T, E)
    slab_ref[...] = jnp.concatenate([attn, xn2, logits], axis=-1)  # packed output


def _full_spec(shape):
    nz = (0,) * len(shape)
    return pl.BlockSpec(shape, lambda *_: nz)


def attention_block(hidden2d, mask2d, in_ln_w, w_qkv, qw_t, kw_t, cos_t, sin_t,
                    gmat, rotmat, w_o, post_ln_w, w_router, *, eps=EPS):
    Tn, Hn = hidden2d.shape
    scale = 1.0 / (D ** 0.5)
    args = (hidden2d, mask2d, in_ln_w, w_qkv, qw_t, kw_t, cos_t, sin_t,
            gmat, rotmat, w_o, post_ln_w, w_router)
    # TODO(synk): at real sizes, re-split the batch/sequence onto a grid axis and use
    # pltpu.CORE_PARALLEL on v7x (2 TCs); at these shapes a single step is cheapest.
    return pl.pallas_call(
        functools.partial(_attn_block_kernel, eps=eps, scale=scale),
        out_shape=(jax.ShapeDtypeStruct((Tn, 2 * Hn + E), jnp.float32),
                   jax.ShapeDtypeStruct((Tn, 2 * NKV * D), jnp.float32)),
        grid=(1,),
        in_specs=[_full_spec(a.shape) for a in args],
        out_specs=(_full_spec((Tn, 2 * Hn + E)), _full_spec((Tn, 2 * NKV * D))),
        compiler_params=pltpu.CompilerParams(dimension_semantics=("arbitrary",)),
    )(*args)


def _moe_kernel(active_ref, fidx_ref, slab_ref, fullw_ref, wg_ref, wu_ref, wd_ref,
                o_ref, *, hidden):
    e = pl.program_id(0)

    @pl.when(e == 0)
    def _():
        o_ref[...] = slab_ref[:, :hidden]          # residual add fused into the init

    @pl.when(active_ref[e] > 0)                    # skip experts no token routed to
    def _():
        xn = slab_ref[:, hidden:2 * hidden]                                   # (T, H)
        lane = jax.lax.broadcasted_iota(jnp.int32, fullw_ref.shape, 1)
        rw = jnp.sum(jnp.where(lane == e, fullw_ref[...], 0.0),
                     axis=-1, keepdims=True)                                  # (T, 1)
        xb = xn.astype(jnp.bfloat16)
        g = jnp.dot(xb, wg_ref[0], preferred_element_type=jnp.float32)        # (T, I)
        u = jnp.dot(xb, wu_ref[0], preferred_element_type=jnp.float32)        # (T, I)
        a = (g * jax.nn.sigmoid(g) * u).astype(jnp.bfloat16)
        y = jnp.dot(a, wd_ref[0], preferred_element_type=jnp.float32)         # (T, H)
        o_ref[...] += rw * y


def moe_experts(slab, full_w, active, fidx, wg, wu, wd):
    # TODO(synk): for real Qwen3-MoE sizes, sort/group tokens by expert (true sparse
    # MoE), add an I-tiling grid axis, and set vmem_limit_bytes explicitly so
    # double-buffered bf16 expert weights fit v7x/v5e scoped VMEM.
    Tn = slab.shape[0]
    En, Hn, In = wg.shape
    grid_spec = pltpu.PrefetchScalarGridSpec(
        num_scalar_prefetch=2,
        grid=(En,),
        in_specs=[
            pl.BlockSpec(slab.shape, lambda e, act, fx: (0, 0)),        # resident
            pl.BlockSpec(full_w.shape, lambda e, act, fx: (0, 0)),      # resident
            pl.BlockSpec((1, Hn, In), lambda e, act, fx: (fx[e], 0, 0)),  # DMA dedup
            pl.BlockSpec((1, Hn, In), lambda e, act, fx: (fx[e], 0, 0)),
            pl.BlockSpec((1, In, Hn), lambda e, act, fx: (fx[e], 0, 0)),
        ],
        out_specs=pl.BlockSpec((Tn, Hn), lambda e, act, fx: (0, 0)),
    )
    return pl.pallas_call(
        functools.partial(_moe_kernel, hidden=Hn),
        grid_spec=grid_spec,
        out_shape=jax.ShapeDtypeStruct((Tn, Hn), jnp.float32),
        compiler_params=pltpu.CompilerParams(dimension_semantics=("arbitrary",)),
    )(active, fidx, slab, full_w, wg, wu, wd)


# ----------------------------- parameter init (deterministic) -----------------------------
def init_params(key):
    ks = jax.random.split(key, 6)
    s = 0.02
    return {
        "input_ln_w": jnp.ones((H,), jnp.float32),
        "post_ln_w": jnp.ones((H,), jnp.float32),
        "q_ln_w": jnp.ones((D,), jnp.float32),
        "k_ln_w": jnp.ones((D,), jnp.float32),
        # fused [Wq | Wk | Wv] along N -> lane-dense 128-wide projection; bf16 weights
        "w_qkv": (s * jax.random.normal(ks[0], (H, NQKV), jnp.float32)).astype(jnp.bfloat16),
        "wo": (s * jax.random.normal(ks[1], (NH * D, H), jnp.float32)).astype(jnp.bfloat16),
        "router_w": s * jax.random.normal(ks[2], (H, E), jnp.float32),
        "w_gate": (s * jax.random.normal(ks[3], (E, H, I), jnp.float32)).astype(jnp.bfloat16),
        "w_up": (s * jax.random.normal(ks[4], (E, H, I), jnp.float32)).astype(jnp.bfloat16),
        "w_down": (s * jax.random.normal(ks[5], (E, I, H), jnp.float32)).astype(jnp.bfloat16),
    }


# ----------------------------- host-side helpers -----------------------------
def rope_cache(position_ids):
    # position_ids: (B, S) int32 -> cos/sin caches (B, S, D)
    inv_freq = 1.0 / (THETA ** (jnp.arange(0, D, 2, dtype=jnp.float32) / D))
    freqs = position_ids.astype(jnp.float32)[..., None] * inv_freq       # (B, S, D/2)
    emb = jnp.concatenate([freqs, freqs], axis=-1)                       # (B, S, D)
    return jnp.cos(emb), jnp.sin(emb)


def rotate_half_matrix():
    # R such that x @ R == rotate_half(x) == concat([-x2, x1]); R = [[0, I], [-I, 0]]
    half = D // 2
    eye = jnp.eye(half, dtype=jnp.float32)
    zero = jnp.zeros((half, half), jnp.float32)
    return jnp.concatenate([jnp.concatenate([zero, eye], axis=1),
                            jnp.concatenate([-eye, zero], axis=1)], axis=0)   # (D, D)


def build_block_mask(attention_mask):
    # (B, 1, S, S) additive mask -> (B*S, B*S) block-diagonal mask (cross-batch = -1e9)
    Bn, _, Sn, _ = attention_mask.shape
    m = jnp.full((Bn, Sn, Bn, Sn), -1e9, dtype=jnp.float32)
    idx = jnp.arange(Bn)
    m = m.at[idx, :, idx, :].set(attention_mask[:, 0].astype(jnp.float32))
    return m.reshape(Bn * Sn, Bn * Sn)


# ----------------------------- decoder layer forward -----------------------------
def decoder_layer_forward(params, hidden_states, attention_mask, position_ids):
    Bn, Sn, Hn = hidden_states.shape
    Tn = Bn * Sn
    cos, sin = rope_cache(position_ids)

    cos_t = jnp.tile(cos.reshape(Tn, D), (1, NH))                         # (T, NH*D)
    sin_t = jnp.tile(sin.reshape(Tn, D), (1, NH))
    gmat = jnp.kron(jnp.eye(NH, dtype=jnp.float32),
                    jnp.full((D, D), 1.0 / D, jnp.float32))               # per-head mean
    rotmat = jnp.kron(jnp.eye(NH, dtype=jnp.float32), rotate_half_matrix())
    mask2d = build_block_mask(attention_mask)
    qw_t = jnp.tile(params["q_ln_w"], NH).reshape(1, NH * D)
    kw_t = jnp.tile(params["k_ln_w"], NKV).reshape(1, NKV * D)

    # --- fused input_norm + attention + residual + post_norm + router (1 kernel) ---
    slab, kv_flat = attention_block(
        hidden_states.reshape(Tn, Hn), mask2d, params["input_ln_w"].reshape(1, Hn),
        params["w_qkv"], qw_t, kw_t, cos_t, sin_t, gmat, rotmat,
        params["wo"], params["post_ln_w"].reshape(1, Hn), params["router_w"])

    # present_key_value in (B, NKV, S, D); tiny, off the hot path.
    k_cache = kv_flat[:, :NKV * D].reshape(Bn, Sn, NKV, D).transpose(0, 2, 1, 3)
    v_cache = kv_flat[:, NKV * D:].reshape(Bn, Sn, NKV, D).transpose(0, 2, 1, 3)
    present_key_value = (k_cache, v_cache)

    router_logits = slab[:, 2 * Hn:]                                      # (T, E)
    # TODO(synk): softmax + top-k expert selection has no clean Pallas equivalent; host JAX.
    probs = jax.nn.softmax(router_logits.astype(jnp.float32), axis=-1)
    top_w, top_i = jax.lax.top_k(probs, TOP_K)
    if NORM_TOPK_PROB:
        top_w = top_w / jnp.sum(top_w, axis=-1, keepdims=True)
    full_w = jnp.zeros((Tn, E), jnp.float32)
    for kk in range(TOP_K):
        full_w = full_w + jax.nn.one_hot(top_i[:, kk], E, dtype=jnp.float32) * top_w[:, kk:kk + 1]

    active = (jnp.max(full_w, axis=0) > 0.0).astype(jnp.int32)            # (E,)
    # fetch-index: inactive experts reuse the previously fetched weight block (DMA dedup)
    fidx = jax.lax.cummax(jnp.where(active > 0, jnp.arange(E, dtype=jnp.int32),
                                    jnp.zeros((E,), jnp.int32)), axis=0)

    hidden_out = moe_experts(slab, full_w, active, fidx,
                             params["w_gate"], params["w_up"], params["w_down"])
    hidden_states = hidden_out.reshape(Bn, Sn, Hn)

    return (hidden_states, present_key_value, cos, sin, None)


# ----------------------------- main -----------------------------
if __name__ == "__main__":
    key = jax.random.PRNGKey(0)
    k_p, k_x = jax.random.split(key)
    params = init_params(k_p)

    hidden_states = jax.random.normal(k_x, (B, S, H), jnp.float32)
    position_ids = jnp.broadcast_to(jnp.arange(S, dtype=jnp.int32), (B, S))
    causal = jnp.tril(jnp.ones((S, S), jnp.bool_))
    attention_mask = jnp.where(causal, 0.0, -1e9).astype(jnp.float32)[None, None]  # (1,1,S,S)
    attention_mask = jnp.broadcast_to(attention_mask, (B, 1, S, S))

    layer = jax.jit(decoder_layer_forward)
    outputs = layer(params, hidden_states, attention_mask, position_ids)
    jax.block_until_ready(outputs[0])
    assert outputs[0].shape == (B, S, H)
    assert jnp.all(jnp.isfinite(outputs[0]))
    print("KERNEL_OK")
</pallas_src>

<mosaic_0001>
module attributes {stable_mosaic.version = 11 : i64} {
  func.func @_attn_block_kernel(%arg0: i32, %arg1: memref<16x32xf32, #tpu.memory_space<vmem>>, %arg2: memref<16x16xf32, #tpu.memory_space<vmem>>, %arg3: memref<1x32xf32, #tpu.memory_space<vmem>>, %arg4: memref<32x128xbf16, #tpu.memory_space<vmem>>, %arg5: memref<1x64xf32, #tpu.memory_space<vmem>>, %arg6: memref<1x32xf32, #tpu.memory_space<vmem>>, %arg7: memref<16x64xf32, #tpu.memory_space<vmem>>, %arg8: memref<16x64xf32, #tpu.memory_space<vmem>>, %arg9: memref<64x64xf32, #tpu.memory_space<vmem>>, %arg10: memref<64x64xf32, #tpu.memory_space<vmem>>, %arg11: memref<64x32xbf16, #tpu.memory_space<vmem>>, %arg12: memref<1x32xf32, #tpu.memory_space<vmem>>, %arg13: memref<32x4xf32, #tpu.memory_space<vmem>>, %arg14: memref<16x68xf32, #tpu.memory_space<vmem>>, %arg15: memref<16x64xf32, #tpu.memory_space<vmem>>) attributes {dimension_semantics = [#tpu.dimension_semantics<arbitrary>], iteration_bounds = array<i64: 1>, scalar_prefetch = 0 : i64, scratch_operands = 0 : i64, tpu.core_type = #tpu.core_type<tc>, window_params = [{pipeline_mode = #tpu.pipeline_mode<synchronous>, transform_indices = @transform_0, window_bounds = array<i64: 16, 32>}, {pipeline_mode = #tpu.pipeline_mode<synchronous>, transform_indices = @transform_1, window_bounds = array<i64: 16, 16>}, {pipeline_mode = #tpu.pipeline_mode<synchronous>, transform_indices = @transform_2, window_bounds = array<i64: 1, 32>}, {pipeline_mode = #tpu.pipeline_mode<synchronous>, transform_indices = @transform_3, window_bounds = array<i64: 32, 128>}, {pipeline_mode = #tpu.pipeline_mode<synchronous>, transform_indices = @transform_4, window_bounds = array<i64: 1, 64>}, {pipeline_mode = #tpu.pipeline_mode<synchronous>, transform_indices = @transform_5, window_bounds = array<i64: 1, 32>}, {pipeline_mode = #tpu.pipeline_mode<synchronous>, transform_indices = @transform_6, window_bounds = array<i64: 16, 64>}, {pipeline_mode = #tpu.pipeline_mode<synchronous>, transform_indices = @transform_7, window_bounds = array<i64: 16, 64>}, {pipeline_mode = #tpu.pipeline_mode<synchronous>, transform_indices = @transform_8, window_bounds = array<i64: 64, 64>}, {pipeline_mode = #tpu.pipeline_mode<synchronous>, transform_indices = @transform_9, window_bounds = array<i64: 64, 64>}, {pipeline_mode = #tpu.pipeline_mode<synchronous>, transform_indices = @transform_10, window_bounds = array<i64: 64, 32>}, {pipeline_mode = #tpu.pipeline_mode<synchronous>, transform_indices = @transform_11, window_bounds = array<i64: 1, 32>}, {pipeline_mode = #tpu.pipeline_mode<synchronous>, transform_indices = @transform_12, window_bounds = array<i64: 32, 4>}, {pipeline_mode = #tpu.pipeline_mode<synchronous>, transform_indices = @transform_13, window_bounds = array<i64: 16, 68>}, {pipeline_mode = #tpu.pipeline_mode<synchronous>, transform_indices = @transform_14, window_bounds = array<i64: 16, 64>}]} {
    %c0 = arith.constant 0 : index
    %c0_0 = arith.constant 0 : index
    %0 = vector.load %arg1[%c0, %c0_0] : memref<16x32xf32, #tpu.memory_space<vmem>>, vector<16x32xf32>
    %1 = arith.mulf %0, %0 : vector<16x32xf32>
    %cst = arith.constant dense<0.000000e+00> : vector<16xf32>
    %2 = vector.multi_reduction <add>, %1, %cst [1] : vector<16x32xf32> to vector<16xf32>
    %3 = vector.shape_cast %2 : vector<16xf32> to vector<16x1xf32>
    %cst_1 = arith.constant 3.200000e+01 : f32
    %4 = vector.broadcast %cst_1 : f32 to vector<16x1xf32>
    %5 = arith.divf %3, %4 : vector<16x1xf32>
    %cst_2 = arith.constant 9.99999997E-7 : f32
    %6 = vector.broadcast %cst_2 : f32 to vector<16x1xf32>
    %7 = arith.addf %5, %6 : vector<16x1xf32>
    %8 = math.rsqrt %7 : vector<16x1xf32>
    %9 = vector.broadcast %8 : vector<16x1xf32> to vector<16x32xf32>
    %10 = arith.mulf %0, %9 : vector<16x32xf32>
    %c0_3 = arith.constant 0 : index
    %c0_4 = arith.constant 0 : index
    %11 = vector.load %arg3[%c0_3, %c0_4] : memref<1x32xf32, #tpu.memory_space<vmem>>, vector<1x32xf32>
    %12 = vector.broadcast %11 : vector<1x32xf32> to vector<16x32xf32>
    %13 = arith.mulf %10, %12 : vector<16x32xf32>
    %14 = arith.truncf %13 : vector<16x32xf32> to vector<16x32xbf16>
    %c0_5 = arith.constant 0 : index
    %c0_6 = arith.constant 0 : index
    %15 = vector.load %arg4[%c0_5, %c0_6] : memref<32x128xbf16, #tpu.memory_space<vmem>>, vector<32x128xbf16>
    %cst_7 = arith.constant dense<0.000000e+00> : vector<16x128xf32>
    %16 = tpu.matmul %14, %15, %cst_7 {dimension_numbers = #tpu.dot_dimension_numbers<[1], [0], [0], [1], [0, 0, 1, 1], [], []>} : vector<16x32xbf16>, vector<32x128xbf16>, vector<16x128xf32> -> vector<16x128xf32>
    %17 = vector.extract_strided_slice %16 {offsets = [0, 0], sizes = [16, 64], strides = [1, 1]} : vector<16x128xf32> to vector<16x64xf32>
    %18 = vector.extract_strided_slice %16 {offsets = [0, 64], sizes = [16, 32], strides = [1, 1]} : vector<16x128xf32> to vector<16x32xf32>
    %19 = vector.extract_strided_slice %16 {offsets = [0, 96], sizes = [16, 32], strides = [1, 1]} : vector<16x128xf32> to vector<16x32xf32>
    %c0_8 = arith.constant 0 : index
    %c0_9 = arith.constant 0 : index
    %20 = vector.load %arg7[%c0_8, %c0_9] : memref<16x64xf32, #tpu.memory_space<vmem>>, vector<16x64xf32>
    %c0_10 = arith.constant 0 : index
    %c0_11 = arith.constant 0 : index
    %21 = vector.load %arg8[%c0_10, %c0_11] : memref<16x64xf32, #tpu.memory_space<vmem>>, vector<16x64xf32>
    %c0_12 = arith.constant 0 : index
    %c0_13 = arith.constant 0 : index
    %22 = vector.load %arg5[%c0_12, %c0_13] : memref<1x64xf32, #tpu.memory_space<vmem>>, vector<1x64xf32>
    %23 = arith.mulf %17, %17 : vector<16x64xf32>
    %c0_14 = arith.constant 0 : index
    %c0_15 = arith.constant 0 : index
    %24 = vector.load %arg9[%c0_14, %c0_15] : memref<64x64xf32, #tpu.memory_space<vmem>>, vector<64x64xf32>
    %cst_16 = arith.constant dense<0.000000e+00> : vector<16x64xf32>
    %25 = tpu.matmul %23, %24, %cst_16 {dimension_numbers = #tpu.dot_dimension_numbers<[1], [0], [0], [1], [0, 0, 1, 1], [], []>} : vector<16x64xf32>, vector<64x64xf32>, vector<16x64xf32> -> vector<16x64xf32>
    %cst_17 = arith.constant 9.99999997E-7 : f32
    %26 = vector.broadcast %cst_17 : f32 to vector<16x64xf32>
    %27 = arith.addf %25, %26 : vector<16x64xf32>
    %28 = math.rsqrt %27 : vector<16x64xf32>
    %29 = arith.mulf %17, %28 : vector<16x64xf32>
    %30 = vector.broadcast %22 : vector<1x64xf32> to vector<16x64xf32>
    %31 = arith.mulf %29, %30 : vector<16x64xf32>
    %c0_18 = arith.constant 0 : index
    %c0_19 = arith.constant 0 : index
    %32 = vector.load %arg10[%c0_18, %c0_19] : memref<64x64xf32, #tpu.memory_space<vmem>>, vector<64x64xf32>
    %cst_20 = arith.constant dense<0.000000e+00> : vector<16x64xf32>
    %33 = tpu.matmul %31, %32, %cst_20 {dimension_numbers = #tpu.dot_dimension_numbers<[1], [0], [0], [1], [0, 0, 1, 1], [], []>} : vector<16x64xf32>, vector<64x64xf32>, vector<16x64xf32> -> vector<16x64xf32>
    %34 = arith.mulf %31, %20 : vector<16x64xf32>
    %35 = arith.mulf %33, %21 : vector<16x64xf32>
    %36 = arith.addf %34, %35 : vector<16x64xf32>
    %c0_21 = arith.constant 0 : index
    %c0_22 = arith.constant 0 : index
    %37 = vector.load %arg6[%c0_21, %c0_22] : memref<1x32xf32, #tpu.memory_space<vmem>>, vector<1x32xf32>
    %38 = arith.mulf %18, %18 : vector<16x32xf32>
    %c0_23 = arith.constant 0 : index
    %c0_24 = arith.constant 0 : index
    %39 = vector.load %arg9[%c0_23, %c0_24] : memref<64x64xf32, #tpu.memory_space<vmem>>, vector<32x32xf32>
    %cst_25 = arith.constant dense<0.000000e+00> : vector<16x32xf32>
    %40 = tpu.matmul %38, %39, %cst_25 {dimension_numbers = #tpu.dot_dimension_numbers<[1], [0], [0], [1], [0, 0, 1, 1], [], []>} : vector<16x32xf32>, vector<32x32xf32>, vector<16x32xf32> -> vector<16x32xf32>
    %cst_26 = arith.constant 9.99999997E-7 : f32
    %41 = vector.broadcast %cst_26 : f32 to vector<16x32xf32>
    %42 = arith.addf %40, %41 : vector<16x32xf32>
    %43 = math.rsqrt %42 : vector<16x32xf32>
    %44 = arith.mulf %18, %43 : vector<16x32xf32>
    %45 = vector.broadcast %37 : vector<1x32xf32> to vector<16x32xf32>
    %46 = arith.mulf %44, %45 : vector<16x32xf32>
    %c0_27 = arith.constant 0 : index
    %c0_28 = arith.constant 0 : index
    %47 = vector.load %arg10[%c0_27, %c0_28] : memref<64x64xf32, #tpu.memory_space<vmem>>, vector<32x32xf32>
    %cst_29 = arith.constant dense<0.000000e+00> : vector<16x32xf32>
    %48 = tpu.matmul %46, %47, %cst_29 {dimension_numbers = #tpu.dot_dimension_numbers<[1], [0], [0], [1], [0, 0, 1, 1], [], []>} : vector<16x32xf32>, vector<32x32xf32>, vector<16x32xf32> -> vector<16x32xf32>
    %49 = vector.extract_strided_slice %20 {offsets = [0, 0], sizes = [16, 32], strides = [1, 1]} : vector<16x64xf32> to vector<16x32xf32>
    %50 = arith.mulf %46, %49 : vector<16x32xf32>
    %51 = vector.extract_strided_slice %21 {offsets = [0, 0], sizes = [16, 32], strides = [1, 1]} : vector<16x64xf32> to vector<16x32xf32>
    %52 = arith.mulf %48, %51 : vector<16x32xf32>
    %53 = arith.addf %50, %52 : vector<16x32xf32>
    %54 = tpu.concatenate %53, %19 in 1 : vector<16x32xf32>, vector<16x32xf32> -> vector<16x64xf32>
    %c0_30 = arith.constant 0 : index
    %c0_31 = arith.constant 0 : index
    %55 = vector.load %arg15[%c0_30, %c0_31] : memref<16x64xf32, #tpu.memory_space<vmem>>, vector<16x64xf32>
    tpu.vector_store %arg15[%c0_30, %c0_31], %54 {strides = array<i32>} : memref<16x64xf32, #tpu.memory_space<vmem>>, vector<16x64xf32>,
    %c0_32 = arith.constant 0 : index
    %c0_33 = arith.constant 0 : index
    %56 = vector.load %arg2[%c0_32, %c0_33] : memref<16x16xf32, #tpu.memory_space<vmem>>, vector<16x16xf32>
    %57 = vector.extract_strided_slice %36 {offsets = [0, 0], sizes = [16, 16], strides = [1, 1]} : vector<16x64xf32> to vector<16x16xf32>
    %58 = vector.extract_strided_slice %53 {offsets = [0, 0], sizes = [16, 16], strides = [1, 1]} : vector<16x32xf32> to vector<16x16xf32>
    %59 = vector.extract_strided_slice %19 {offsets = [0, 0], sizes = [16, 16], strides = [1, 1]} : vector<16x32xf32> to vector<16x16xf32>
    %cst_34 = arith.constant dense<0.000000e+00> : vector<16x16xf32>
    %60 = tpu.matmul %57, %58, %cst_34 {dimension_numbers = #tpu.dot_dimension_numbers<[1], [1], [0], [0], [0, 0, 1, 0], [], []>} : vector<16x16xf32>, vector<16x16xf32>, vector<16x16xf32> -> vector<16x16xf32>
    %cst_35 = arith.constant 2.500000e-01 : f32
    %61 = vector.broadcast %cst_35 : f32 to vector<16x16xf32>
    %62 = arith.mulf %60, %61 : vector<16x16xf32>
    %63 = arith.addf %62, %56 : vector<16x16xf32>
    %cst_36 = arith.constant dense<0xFF800000> : vector<16xf32>
    %64 = vector.multi_reduction <maximumf>, %63, %cst_36 [1] : vector<16x16xf32> to vector<16xf32>
    %65 = vector.shape_cast %64 : vector<16xf32> to vector<16x1xf32>
    %66 = vector.broadcast %65 : vector<16x1xf32> to vector<16x16xf32>
    %67 = arith.subf %63, %66 : vector<16x16xf32>
    %68 = math.exp %67 : vector<16x16xf32>
    %cst_37 = arith.constant dense<0.000000e+00> : vector<16xf32>
    %69 = vector.multi_reduction <add>, %68, %cst_37 [1] : vector<16x16xf32> to vector<16xf32>
    %70 = vector.shape_cast %69 : vector<16xf32> to vector<16x1xf32>
    %71 = tpu.reciprocal %70 {approx = true} : vector<16x1xf32> -> vector<16x1xf32>
    %72 = vector.broadcast %71 : vector<16x1xf32> to vector<16x16xf32>
    %73 = arith.mulf %68, %72 : vector<16x16xf32>
    %cst_38 = arith.constant dense<0.000000e+00> : vector<16x16xf32>
    %74 = tpu.matmul %73, %59, %cst_38 {dimension_numbers = #tpu.dot_dimension_numbers<[1], [0], [0], [1], [0, 0, 1, 1], [], []>} : vector<16x16xf32>, vector<16x16xf32>, vector<16x16xf32> -> vector<16x16xf32>
    %75 = vector.extract_strided_slice %36 {offsets = [0, 16], sizes = [16, 16], strides = [1, 1]} : vector<16x64xf32> to vector<16x16xf32>
    %76 = vector.extract_strided_slice %53 {offsets = [0, 0], sizes = [16, 16], strides = [1, 1]} : vector<16x32xf32> to vector<16x16xf32>
    %77 = vector.extract_strided_slice %19 {offsets = [0, 0], sizes = [16, 16], strides = [1, 1]} : vector<16x32xf32> to vector<16x16xf32>
    %cst_39 = arith.constant dense<0.000000e+00> : vector<16x16xf32>
    %78 = tpu.matmul %75, %76, %cst_39 {dimension_numbers = #tpu.dot_dimension_numbers<[1], [1], [0], [0], [0, 0, 1, 0], [], []>} : vector<16x16xf32>, vector<16x16xf32>, vector<16x16xf32> -> vector<16x16xf32>
    %cst_40 = arith.constant 2.500000e-01 : f32
    %79 = vector.broadcast %cst_40 : f32 to vector<16x16xf32>
    %80 = arith.mulf %78, %79 : vector<16x16xf32>
    %81 = arith.addf %80, %56 : vector<16x16xf32>
    %cst_41 = arith.constant dense<0xFF800000> : vector<16xf32>
    %82 = vector.multi_reduction <maximumf>, %81, %cst_41 [1] : vector<16x16xf32> to vector<16xf32>
    %83 = vector.shape_cast %82 : vector<16xf32> to vector<16x1xf32>
    %84 = vector.broadcast %83 : vector<16x1xf32> to vector<16x16xf32>
    %85 = arith.subf %81, %84 : vector<16x16xf32>
    %86 = math.exp %85 : vector<16x16xf32>
    %cst_42 = arith.constant dense<0.000000e+00> : vector<16xf32>
    %87 = vector.multi_reduction <add>, %86, %cst_42 [1] : vector<16x16xf32> to vector<16xf32>
    %88 = vector.shape_cast %87 : vector<16xf32> to vector<16x1xf32>
    %89 = tpu.reciprocal %88 {approx = true} : vector<16x1xf32> -> vector<16x1xf32>
    %90 = vector.broadcast %89 : vector<16x1xf32> to vector<16x16xf32>
    %91 = arith.mulf %86, %90 : vector<16x16xf32>
    %cst_43 = arith.constant dense<0.000000e+00> : vector<16x16xf32>
    %92 = tpu.matmul %91, %77, %cst_43 {dimension_numbers = #tpu.dot_dimension_numbers<[1], [0], [0], [1], [0, 0, 1, 1], [], []>} : vector<16x16xf32>, vector<16x16xf32>, vector<16x16xf32> -> vector<16x16xf32>
    %93 = vector.extract_strided_slice %36 {offsets = [0, 32], sizes = [16, 16], strides = [1, 1]} : vector<16x64xf32> to vector<16x16xf32>
    %94 = vector.extract_strided_slice %53 {offsets = [0, 16], sizes = [16, 16], strides = [1, 1]} : vector<16x32xf32> to vector<16x16xf32>
    %95 = vector.extract_strided_slice %19 {offsets = [0, 16], sizes = [16, 16], strides = [1, 1]} : vector<16x32xf32> to vector<16x16xf32>
    %cst_44 = arith.constant dense<0.000000e+00> : vector<16x16xf32>
    %96 = tpu.matmul %93, %94, %cst_44 {dimension_numbers = #tpu.dot_dimension_numbers<[1], [1], [0], [0], [0, 0, 1, 0], [], []>} : vector<16x16xf32>, vector<16x16xf32>, vector<16x16xf32> -> vector<16x16xf32>
    %cst_45 = arith.constant 2.500000e-01 : f32
    %97 = vector.broadcast %cst_45 : f32 to vector<16x16xf32>
    %98 = arith.mulf %96, %97 : vector<16x16xf32>
    %99 = arith.addf %98, %56 : vector<16x16xf32>
    %cst_46 = arith.constant dense<0xFF800000> : vector<16xf32>
    %100 = vector.multi_reduction <maximumf>, %99, %cst_46 [1] : vector<16x16xf32> to vector<16xf32>
    %101 = vector.shape_cast %100 : vector<16xf32> to vector<16x1xf32>
    %102 = vector.broadcast %101 : vector<16x1xf32> to vector<16x16xf32>
    %103 = arith.subf %99, %102 : vector<16x16xf32>
    %104 = math.exp %103 : vector<16x16xf32>
    %cst_47 = arith.constant dense<0.000000e+00> : vector<16xf32>
    %105 = vector.multi_reduction <add>, %104, %cst_47 [1] : vector<16x16xf32> to vector<16xf32>
    %106 = vector.shape_cast %105 : vector<16xf32> to vector<16x1xf32>
    %107 = tpu.reciprocal %106 {approx = true} : vector<16x1xf32> -> vector<16x1xf32>
    %108 = vector.broadcast %107 : vector<16x1xf32> to vector<16x16xf32>
    %109 = arith.mulf %104, %108 : vector<16x16xf32>
    %cst_48 = arith.constant dense<0.000000e+00> : vector<16x16xf32>
    %110 = tpu.matmul %109, %95, %cst_48 {dimension_numbers = #tpu.dot_dimension_numbers<[1], [0], [0], [1], [0, 0, 1, 1], [], []>} : vector<16x16xf32>, vector<16x16xf32>, vector<16x16xf32> -> vector<16x16xf32>
    %111 = vector.extract_strided_slice %36 {offsets = [0, 48], sizes = [16, 16], strides = [1, 1]} : vector<16x64xf32> to vector<16x16xf32>
    %112 = vector.extract_strided_slice %53 {offsets = [0, 16], sizes = [16, 16], strides = [1, 1]} : vector<16x32xf32> to vector<16x16xf32>
    %113 = vector.extract_strided_slice %19 {offsets = [0, 16], sizes = [16, 16], strides = [1, 1]} : vector<16x32xf32> to vector<16x16xf32>
    %cst_49 = arith.constant dense<0.000000e+00> : vector<16x16xf32>
    %114 = tpu.matmul %111, %112, %cst_49 {dimension_numbers = #tpu.dot_dimension_numbers<[1], [1], [0], [0], [0, 0, 1, 0], [], []>} : vector<16x16xf32>, vector<16x16xf32>, vector<16x16xf32> -> vector<16x16xf32>
    %cst_50 = arith.constant 2.500000e-01 : f32
    %115 = vector.broadcast %cst_50 : f32 to vector<16x16xf32>
    %116 = arith.mulf %114, %115 : vector<16x16xf32>
    %117 = arith.addf %116, %56 : vector<16x16xf32>
    %cst_51 = arith.constant dense<0xFF800000> : vector<16xf32>
    %118 = vector.multi_reduction <maximumf>, %117, %cst_51 [1] : vector<16x16xf32> to vector<16xf32>
    %119 = vector.shape_cast %118 : vector<16xf32> to vector<16x1xf32>
    %120 = vector.broadcast %119 : vector<16x1xf32> to vector<16x16xf32>
    %121 = arith.subf %117, %120 : vector<16x16xf32>
    %122 = math.exp %121 : vector<16x16xf32>
    %cst_52 = arith.constant dense<0.000000e+00> : vector<16xf32>
    %123 = vector.multi_reduction <add>, %122, %cst_52 [1] : vector<16x16xf32> to vector<16xf32>
    %124 = vector.shape_cast %123 : vector<16xf32> to vector<16x1xf32>
    %125 = tpu.reciprocal %124 {approx = true} : vector<16x1xf32> -> vector<16x1xf32>
    %126 = vector.broadcast %125 : vector<16x1xf32> to vector<16x16xf32>
    %127 = arith.mulf %122, %126 : vector<16x16xf32>
    %cst_53 = arith.constant dense<0.000000e+00> : vector<16x16xf32>
    %128 = tpu.matmul %127, %113, %cst_53 {dimension_numbers = #tpu.dot_dimension_numbers<[1], [0], [0], [1], [0, 0, 1, 1], [], []>} : vector<16x16xf32>, vector<16x16xf32>, vector<16x16xf32> -> vector<16x16xf32>
    %129 = tpu.concatenate %74, %92, %110, %128 in 1 : vector<16x16xf32>, vector<16x16xf32>, vector<16x16xf32>, vector<16x16xf32> -> vector<16x64xf32>
    %130 = arith.truncf %129 : vector<16x64xf32> to vector<16x64xbf16>
    %c0_54 = arith.constant 0 : index
    %c0_55 = arith.constant 0 : index
    %131 = vector.load %arg11[%c0_54, %c0_55] : memref<64x32xbf16, #tpu.memory_space<vmem>>, vector<64x32xbf16>
    %cst_56 = arith.constant dense<0.000000e+00> : vector<16x32xf32>
    %132 = tpu.matmul %130, %131, %cst_56 {dimension_numbers = #tpu.dot_dimension_numbers<[1], [0], [0], [1], [0, 0, 1, 1], [], []>} : vector<16x64xbf16>, vector<64x32xbf16>, vector<16x32xf32> -> vector<16x32xf32>
    %133 = arith.addf %0, %132 : vector<16x32xf32>
    %134 = arith.mulf %133, %133 : vector<16x32xf32>
    %cst_57 = arith.constant dense<0.000000e+00> : vector<16xf32>
    %135 = vector.multi_reduction <add>, %134, %cst_57 [1] : vector<16x32xf32> to vector<16xf32>
    %136 = vector.shape_cast %135 : vector<16xf32> to vector<16x1xf32>
    %cst_58 = arith.constant 3.200000e+01 : f32
    %137 = vector.broadcast %cst_58 : f32 to vector<16x1xf32>
    %138 = arith.divf %136, %137 : vector<16x1xf32>
    %cst_59 = arith.constant 9.99999997E-7 : f32
    %139 = vector.broadcast %cst_59 : f32 to vector<16x1xf32>
    %140 = arith.addf %138, %139 : vector<16x1xf32>
    %141 = math.rsqrt %140 : vector<16x1xf32>
    %142 = vector.broadcast %141 : vector<16x1xf32> to vector<16x32xf32>
    %143 = arith.mulf %133, %142 : vector<16x32xf32>
    %c0_60 = arith.constant 0 : index
    %c0_61 = arith.constant 0 : index
    %144 = vector.load %arg12[%c0_60, %c0_61] : memref<1x32xf32, #tpu.memory_space<vmem>>, vector<1x32xf32>
    %145 = vector.broadcast %144 : vector<1x32xf32> to vector<16x32xf32>
    %146 = arith.mulf %143, %145 : vector<16x32xf32>
    %c0_62 = arith.constant 0 : index
    %c0_63 = arith.constant 0 : index
    %147 = vector.load %arg13[%c0_62, %c0_63] : memref<32x4xf32, #tpu.memory_space<vmem>>, vector<32x4xf32>
    %cst_64 = arith.constant dense<0.000000e+00> : vector<16x4xf32>
    %148 = tpu.matmul %146, %147, %cst_64 {dimension_numbers = #tpu.dot_dimension_numbers<[1], [0], [0], [1], [0, 0, 1, 1], [], []>} : vector<16x32xf32>, vector<32x4xf32>, vector<16x4xf32> -> vector<16x4xf32>
    %149 = tpu.concatenate %133, %146, %148 in 1 : vector<16x32xf32>, vector<16x32xf32>, vector<16x4xf32> -> vector<16x68xf32>
    %c0_65 = arith.constant 0 : index
    %c0_66 = arith.constant 0 : index
    %150 = vector.load %arg14[%c0_65, %c0_66] : memref<16x68xf32, #tpu.memory_space<vmem>>, vector<16x68xf32>
    tpu.vector_store %arg14[%c0_65, %c0_66], %149 {strides = array<i32>} : memref<16x68xf32, #tpu.memory_space<vmem>>, vector<16x68xf32>,
    return
  }
  func.func @transform_0(%arg0: i32) -> (i32, i32) {
    %c0_i32 = arith.constant 0 : i32
    %c0_i32_0 = arith.constant 0 : i32
    %c0_i32_1 = arith.constant 0 : i32
    return %c0_i32, %c0_i32_0 : i32, i32
  }
  func.func @transform_1(%arg0: i32) -> (i32, i32) {
    %c0_i32 = arith.constant 0 : i32
    %c0_i32_0 = arith.constant 0 : i32
    %c0_i32_1 = arith.constant 0 : i32
    return %c0_i32, %c0_i32_0 : i32, i32
  }
  func.func @transform_2(%arg0: i32) -> (i32, i32) {
    %c0_i32 = arith.constant 0 : i32
    %c0_i32_0 = arith.constant 0 : i32
    %c0_i32_1 = arith.constant 0 : i32
    return %c0_i32, %c0_i32_0 : i32, i32
  }
  func.func @transform_3(%arg0: i32) -> (i32, i32) {
    %c0_i32 = arith.constant 0 : i32
    %c0_i32_0 = arith.constant 0 : i32
    %c0_i32_1 = arith.constant 0 : i32
    return %c0_i32, %c0_i32_0 : i32, i32
  }
  func.func @transform_4(%arg0: i32) -> (i32, i32) {
    %c0_i32 = arith.constant 0 : i32
    %c0_i32_0 = arith.constant 0 : i32
    %c0_i32_1 = arith.constant 0 : i32
    return %c0_i32, %c0_i32_0 : i32, i32
  }
  func.func @transform_5(%arg0: i32) -> (i32, i32) {
    %c0_i32 = arith.constant 0 : i32
    %c0_i32_0 = arith.constant 0 : i32
    %c0_i32_1 = arith.constant 0 : i32
    return %c0_i32, %c0_i32_0 : i32, i32
  }
  func.func @transform_6(%arg0: i32) -> (i32, i32) {
    %c0_i32 = arith.constant 0 : i32
    %c0_i32_0 = arith.constant 0 : i32
    %c0_i32_1 = arith.constant 0 : i32
    return %c0_i32, %c0_i32_0 : i32, i32
  }
  func.func @transform_7(%arg0: i32) -> (i32, i32) {
    %c0_i32 = arith.constant 0 : i32
    %c0_i32_0 = arith.constant 0 : i32
    %c0_i32_1 = arith.constant 0 : i32
    return %c0_i32, %c0_i32_0 : i32, i32
  }
  func.func @transform_8(%arg0: i32) -> (i32, i32) {
    %c0_i32 = arith.constant 0 : i32
    %c0_i32_0 = arith.constant 0 : i32
    %c0_i32_1 = arith.constant 0 : i32
    return %c0_i32, %c0_i32_0 : i32, i32
  }
  func.func @transform_9(%arg0: i32) -> (i32, i32) {
    %c0_i32 = arith.constant 0 : i32
    %c0_i32_0 = arith.constant 0 : i32
    %c0_i32_1 = arith.constant 0 : i32
    return %c0_i32, %c0_i32_0 : i32, i32
  }
  func.func @transform_10(%arg0: i32) -> (i32, i32) {
    %c0_i32 = arith.constant 0 : i32
    %c0_i32_0 = arith.constant 0 : i32
    %c0_i32_1 = arith.constant 0 : i32
    return %c0_i32, %c0_i32_0 : i32, i32
  }
  func.func @transform_11(%arg0: i32) -> (i32, i32) {
    %c0_i32 = arith.constant 0 : i32
    %c0_i32_0 = arith.constant 0 : i32
    %c0_i32_1 = arith.constant 0 : i32
    return %c0_i32, %c0_i32_0 : i32, i32
  }
  func.func @transform_12(%arg0: i32) -> (i32, i32) {
    %c0_i32 = arith.constant 0 : i32
    %c0_i32_0 = arith.constant 0 : i32
    %c0_i32_1 = arith.constant 0 : i32
    return %c0_i32, %c0_i32_0 : i32, i32
  }
  func.func @transform_13(%arg0: i32) -> (i32, i32) {
    %c0_i32 = arith.constant 0 : i32
    %c0_i32_0 = arith.constant 0 : i32
    %c0_i32_1 = arith.constant 0 : i32
    return %c0_i32, %c0_i32_0 : i32, i32
  }
  func.func @transform_14(%arg0: i32) -> (i32, i32) {
    %c0_i32 = arith.constant 0 : i32
    %c0_i32_0 = arith.constant 0 : i32
    %c0_i32_1 = arith.constant 0 : i32
    return %c0_i32, %c0_i32_0 : i32, i32
  }
}

module attributes {stable_mosaic.version = 11 : i64} {
  func.func @_moe_kernel(%arg0: i32, %arg1: memref<4xi32, #tpu.memory_space<smem>>, %arg2: memref<4xi32, #tpu.memory_space<smem>>, %arg3: memref<16x68xf32, #tpu.memory_space<vmem>>, %arg4: memref<16x4xf32, #tpu.memory_space<vmem>>, %arg5: memref<1x32x64xbf16, #tpu.memory_space<vmem>>, %arg6: memref<1x32x64xbf16, #tpu.memory_space<vmem>>, %arg7: memref<1x64x32xbf16, #tpu.memory_space<vmem>>, %arg8: memref<16x32xf32, #tpu.memory_space<vmem>>) attributes {dimension_semantics = [#tpu.dimension_semantics<arbitrary>], iteration_bounds = array<i64: 4>, scalar_prefetch = 2 : i64, scratch_operands = 0 : i64, tpu.core_type = #tpu.core_type<tc>, window_params = [{pipeline_mode = #tpu.pipeline_mode<synchronous>, transform_indices = @transform_0, window_bounds = array<i64: 16, 68>}, {pipeline_mode = #tpu.pipeline_mode<synchronous>, transform_indices = @transform_1, window_bounds = array<i64: 16, 4>}, {transform_indices = @transform_2, window_bounds = array<i64: 1, 32, 64>}, {transform_indices = @transform_3, window_bounds = array<i64: 1, 32, 64>}, {transform_indices = @transform_4, window_bounds = array<i64: 1, 64, 32>}, {pipeline_mode = #tpu.pipeline_mode<synchronous>, transform_indices = @transform_5, window_bounds = array<i64: 16, 32>}]} {
    %c0_i32 = arith.constant 0 : i32
    %0 = arith.cmpi eq, %arg0, %c0_i32 : i32
    %1 = arith.extui %0 : i1 to i32
    %c0_i32_0 = arith.constant 0 : i32
    %2 = arith.cmpi ne, %1, %c0_i32_0 : i32
    scf.if %2 {
      %c0 = arith.constant 0 : index
      %c0_3 = arith.constant 0 : index
      %8 = vector.load %arg3[%c0, %c0_3] : memref<16x68xf32, #tpu.memory_space<vmem>>, vector<16x32xf32>
      %c0_4 = arith.constant 0 : index
      %c0_5 = arith.constant 0 : index
      %9 = vector.load %arg8[%c0_4, %c0_5] : memref<16x32xf32, #tpu.memory_space<vmem>>, vector<16x32xf32>
      tpu.vector_store %arg8[%c0_4, %c0_5], %8 {strides = array<i32>} : memref<16x32xf32, #tpu.memory_space<vmem>>, vector<16x32xf32>,
    } else {
    }
    %3 = arith.index_cast %arg0 : i32 to index
    %4 = memref.load %arg1[%3] : memref<4xi32, #tpu.memory_space<smem>>
    %c0_i32_1 = arith.constant 0 : i32
    %5 = arith.cmpi sgt, %4, %c0_i32_1 : i32
    %6 = arith.extui %5 : i1 to i32
    %c0_i32_2 = arith.constant 0 : i32
    %7 = arith.cmpi ne, %6, %c0_i32_2 : i32
    scf.if %7 {
      %c0 = arith.constant 0 : index
      %c32 = arith.constant 32 : index
      %8 = vector.load %arg3[%c0, %c32] : memref<16x68xf32, #tpu.memory_space<vmem>>, vector<16x32xf32>
      %9 = tpu.iota {dimensions = array<i32: 1>} : vector<16x4xi32>
      %10 = vector.broadcast %arg0 : i32 to vector<16x4xi32>
      %11 = arith.cmpi eq, %9, %10 : vector<16x4xi32>
      %c0_3 = arith.constant 0 : index
      %c0_4 = arith.constant 0 : index
      %12 = vector.load %arg4[%c0_3, %c0_4] : memref<16x4xf32, #tpu.memory_space<vmem>>, vector<16x4xf32>
      %cst = arith.constant 0.000000e+00 : f32
      %13 = vector.broadcast %cst : f32 to vector<16x4xf32>
      %14 = arith.select %11, %12, %13 : vector<16x4xi1>, vector<16x4xf32>
      %cst_5 = arith.constant dense<0.000000e+00> : vector<16xf32>
      %15 = vector.multi_reduction <add>, %14, %cst_5 [1] : vector<16x4xf32> to vector<16xf32>
      %16 = vector.shape_cast %15 : vector<16xf32> to vector<16x1xf32>
      %17 = arith.truncf %8 : vector<16x32xf32> to vector<16x32xbf16>
      %c0_6 = arith.constant 0 : index
      %c0_7 = arith.constant 0 : index
      %c0_8 = arith.constant 0 : index
      %18 = vector.load %arg5[%c0_6, %c0_7, %c0_8] : memref<1x32x64xbf16, #tpu.memory_space<vmem>>, vector<1x32x64xbf16>
      %19 = vector.shape_cast %18 : vector<1x32x64xbf16> to vector<32x64xbf16>
      %cst_9 = arith.constant dense<0.000000e+00> : vector<16x64xf32>
      %20 = tpu.matmul %17, %19, %cst_9 {dimension_numbers = #tpu.dot_dimension_numbers<[1], [0], [0], [1], [0, 0, 1, 1], [], []>} : vector<16x32xbf16>, vector<32x64xbf16>, vector<16x64xf32> -> vector<16x64xf32>
      %c0_10 = arith.constant 0 : index
      %c0_11 = arith.constant 0 : index
      %c0_12 = arith.constant 0 : index
      %21 = vector.load %arg6[%c0_10, %c0_11, %c0_12] : memref<1x32x64xbf16, #tpu.memory_space<vmem>>, vector<1x32x64xbf16>
      %22 = vector.shape_cast %21 : vector<1x32x64xbf16> to vector<32x64xbf16>
      %cst_13 = arith.constant dense<0.000000e+00> : vector<16x64xf32>
      %23 = tpu.matmul %17, %22, %cst_13 {dimension_numbers = #tpu.dot_dimension_numbers<[1], [0], [0], [1], [0, 0, 1, 1], [], []>} : vector<16x32xbf16>, vector<32x64xbf16>, vector<16x64xf32> -> vector<16x64xf32>
      %24 = arith.negf %20 : vector<16x64xf32>
      %25 = math.exp %24 : vector<16x64xf32>
      %cst_14 = arith.constant 1.000000e+00 : f32
      %26 = vector.broadcast %cst_14 : f32 to vector<16x64xf32>
      %27 = arith.addf %26, %25 : vector<16x64xf32>
      %28 = arith.divf %26, %27 : vector<16x64xf32>
      %29 = arith.mulf %20, %28 : vector<16x64xf32>
      %30 = arith.mulf %29, %23 : vector<16x64xf32>
      %31 = arith.truncf %30 : vector<16x64xf32> to vector<16x64xbf16>
      %c0_15 = arith.constant 0 : index
      %c0_16 = arith.constant 0 : index
      %c0_17 = arith.constant 0 : index
      %32 = vector.load %arg7[%c0_15, %c0_16, %c0_17] : memref<1x64x32xbf16, #tpu.memory_space<vmem>>, vector<1x64x32xbf16>
      %33 = vector.shape_cast %32 : vector<1x64x32xbf16> to vector<64x32xbf16>
      %cst_18 = arith.constant dense<0.000000e+00> : vector<16x32xf32>
      %34 = tpu.matmul %31, %33, %cst_18 {dimension_numbers = #tpu.dot_dimension_numbers<[1], [0], [0], [1], [0, 0, 1, 1], [], []>} : vector<16x64xbf16>, vector<64x32xbf16>, vector<16x32xf32> -> vector<16x32xf32>
      %c0_19 = arith.constant 0 : index
      %c0_20 = arith.constant 0 : index
      %35 = vector.load %arg8[%c0_19, %c0_20] : memref<16x32xf32, #tpu.memory_space<vmem>>, vector<16x32xf32>
      %36 = vector.broadcast %16 : vector<16x1xf32> to vector<16x32xf32>
      %37 = arith.mulf %36, %34 : vector<16x32xf32>
      %38 = arith.addf %35, %37 : vector<16x32xf32>
      %c0_21 = arith.constant 0 : index
      %c0_22 = arith.constant 0 : index
      %39 = vector.load %arg8[%c0_21, %c0_22] : memref<16x32xf32, #tpu.memory_space<vmem>>, vector<16x32xf32>
      tpu.vector_store %arg8[%c0_21, %c0_22], %38 {strides = array<i32>} : memref<16x32xf32, #tpu.memory_space<vmem>>, vector<16x32xf32>,
    } else {
    }
    return
  }
  func.func @transform_0(%arg0: i32, %arg1: memref<4xi32, #tpu.memory_space<smem>>, %arg2: memref<4xi32, #tpu.memory_space<smem>>) -> (i32, i32) {
    %c0_i32 = arith.constant 0 : i32
    %c0_i32_0 = arith.constant 0 : i32
    %c0_i32_1 = arith.constant 0 : i32
    return %c0_i32, %c0_i32_0 : i32, i32
  }
  func.func @transform_1(%arg0: i32, %arg1: memref<4xi32, #tpu.memory_space<smem>>, %arg2: memref<4xi32, #tpu.memory_space<smem>>) -> (i32, i32) {
    %c0_i32 = arith.constant 0 : i32
    %c0_i32_0 = arith.constant 0 : i32
    %c0_i32_1 = arith.constant 0 : i32
    return %c0_i32, %c0_i32_0 : i32, i32
  }
  func.func @transform_2(%arg0: i32, %arg1: memref<4xi32, #tpu.memory_space<smem>>, %arg2: memref<4xi32, #tpu.memory_space<smem>>) -> (i32, i32, i32) {
    %0 = arith.index_cast %arg0 : i32 to index
    %1 = memref.load %arg2[%0] : memref<4xi32, #tpu.memory_space<smem>>
    %c0_i32 = arith.constant 0 : i32
    %c0_i32_0 = arith.constant 0 : i32
    %c0_i32_1 = arith.constant 0 : i32
    return %1, %c0_i32, %c0_i32_0 : i32, i32, i32
  }
  func.func @transform_3(%arg0: i32, %arg1: memref<4xi32, #tpu.memory_space<smem>>, %arg2: memref<4xi32, #tpu.memory_space<smem>>) -> (i32, i32, i32) {
    %0 = arith.index_cast %arg0 : i32 to index
    %1 = memref.load %arg2[%0] : memref<4xi32, #tpu.memory_space<smem>>
    %c0_i32 = arith.constant 0 : i32
    %c0_i32_0 = arith.constant 0 : i32
    %c0_i32_1 = arith.constant 0 : i32
    return %1, %c0_i32, %c0_i32_0 : i32, i32, i32
  }
  func.func @transform_4(%arg0: i32, %arg1: memref<4xi32, #tpu.memory_space<smem>>, %arg2: memref<4xi32, #tpu.memory_space<smem>>) -> (i32, i32, i32) {
    %0 = arith.index_cast %arg0 : i32 to index
    %1 = memref.load %arg2[%0] : memref<4xi32, #tpu.memory_space<smem>>
    %c0_i32 = arith.constant 0 : i32
    %c0_i32_0 = arith.constant 0 : i32
    %c0_i32_1 = arith.constant 0 : i32
    return %1, %c0_i32, %c0_i32_0 : i32, i32, i32
  }
  func.func @transform_5(%arg0: i32, %arg1: memref<4xi32, #tpu.memory_space<smem>>, %arg2: memref<4xi32, #tpu.memory_space<smem>>) -> (i32, i32) {
    %c0_i32 = arith.constant 0 : i32
    %c0_i32_0 = arith.constant 0 : i32
    %c0_i32_1 = arith.constant 0 : i32
    return %c0_i32, %c0_i32_0 : i32, i32
  }
}

</mosaic_0001>

<llo_original>
// kernel: tile.21
$region0: #{tile.21}
  %s0 = inlined_call_operand.vmem [shape: f32[16,4,16], index: 0, kind: input, shape index: {}]
  %s1 = inlined_call_operand.vmem [shape: f32[16,64], index: 1, kind: output, shape index: {}]
  $region1: #{tile.21} parent=0
    #allocation0 [shape = 'u8[65536]{0}', space=vmem, size = 0x10000, scoped, tag = 'scoped mem for input reshape']
    %s3 = ssub.s32 16, 1
    %s4 = scalar_lea.vmem %s0, 60
    %v5 = vld [vmem:[%s4] sm:%s3]
    %s6 = scalar_lea.vmem [#allocation0], 120
    %7 = vst [vmem:[%s6] sm:%s3] %v5
    %s8 = scalar_lea.vmem %s0, 56
    %v9 = vld [vmem:[%s8] sm:%s3]
    %s10 = scalar_lea.vmem [#allocation0], 112
    %11 = vst [vmem:[%s10] sm:%s3] %v9
    %s12 = scalar_lea.vmem %s0, 52
    %v13 = vld [vmem:[%s12] sm:%s3]
    %s14 = scalar_lea.vmem [#allocation0], 104
    %15 = vst [vmem:[%s14] sm:%s3] %v13
    %s16 = scalar_lea.vmem %s0, 48
    %v17 = vld [vmem:[%s16] sm:%s3]
    %s18 = scalar_lea.vmem [#allocation0], 96
    %19 = vst [vmem:[%s18] sm:%s3] %v17
    %s20 = scalar_lea.vmem %s0, 44
    %v21 = vld [vmem:[%s20] sm:%s3]
    %s22 = scalar_lea.vmem [#allocation0], 88
    %23 = vst [vmem:[%s22] sm:%s3] %v21
    %s24 = scalar_lea.vmem %s0, 40
    %v25 = vld [vmem:[%s24] sm:%s3]
    %s26 = scalar_lea.vmem [#allocation0], 80
    %27 = vst [vmem:[%s26] sm:%s3] %v25
    %s28 = scalar_lea.vmem %s0, 36
    %v29 = vld [vmem:[%s28] sm:%s3]
    %s30 = scalar_lea.vmem [#allocation0], 72
    %31 = vst [vmem:[%s30] sm:%s3] %v29
    %s32 = scalar_lea.vmem %s0, 32
    %v33 = vld [vmem:[%s32] sm:%s3]
    %s34 = scalar_lea.vmem [#allocation0], 64
    %35 = vst [vmem:[%s34] sm:%s3] %v33
    %s36 = scalar_lea.vmem %s0, 28
    %v37 = vld [vmem:[%s36] sm:%s3]
    %s38 = scalar_lea.vmem [#allocation0], 56
    %39 = vst [vmem:[%s38] sm:%s3] %v37
    %s40 = scalar_lea.vmem %s0, 24
    %v41 = vld [vmem:[%s40] sm:%s3]
    %s42 = scalar_lea.vmem [#allocation0], 48
    %43 = vst [vmem:[%s42] sm:%s3] %v41
    %s44 = scalar_lea.vmem %s0, 20
    %v45 = vld [vmem:[%s44] sm:%s3]
    %s46 = scalar_lea.vmem [#allocation0], 40
    %47 = vst [vmem:[%s46] sm:%s3] %v45
    %s48 = scalar_lea.vmem %s0, 16
    %v49 = vld [vmem:[%s48] sm:%s3]
    %s50 = scalar_lea.vmem [#allocation0], 32
    %51 = vst [vmem:[%s50] sm:%s3] %v49
    %s52 = scalar_lea.vmem %s0, 12
    %v53 = vld [vmem:[%s52] sm:%s3]
    %s54 = scalar_lea.vmem [#allocation0], 24
    %55 = vst [vmem:[%s54] sm:%s3] %v53
    %s56 = scalar_lea.vmem %s0, 8
    %v57 = vld [vmem:[%s56] sm:%s3]
    %s58 = scalar_lea.vmem [#allocation0], 16
    %59 = vst [vmem:[%s58] sm:%s3] %v57
    %s60 = scalar_lea.vmem %s0, 4
    %v61 = vld [vmem:[%s60] sm:%s3]
    %s62 = scalar_lea.vmem [#allocation0], 8
    %63 = vst [vmem:[%s62] sm:%s3] %v61
    %v64 = vld [vmem:[%s0] sm:%s3]
    %65 = vst [vmem:[#allocation0] sm:%s3] %v64
    %v66 = vld [vmem:[#allocation0] ss:$8 sm:$0xf]
    %v67 = vld [vmem:[#allocation0] ss:$8 sm:$0xf0]
    %vm68 = vcmask 1047556
    %v69 = vsel %vm68, %v67, %v66
    %vm70 = vcmask 130048
    %71 = vst.msk [vmem:[%s1] sm:$0xff] %vm70, %v69
    %s72 = scalar_lea.vmem [#allocation0], 64
    %v73 = vld [vmem:[%s72] ss:$8 sm:$0xf]
    %s74 = scalar_lea.vmem [#allocation0], 64
    %v75 = vld [vmem:[%s74] ss:$8 sm:$0xf0]
    %vm76 = vcmask 1047556
    %v77 = vsel %vm76, %v75, %v73
    %vm78 = vcmask 130048
    %s79 = scalar_lea.vmem %s1, 8
    %80 = vst.msk [vmem:[%s79] sm:$0xff] %vm78, %v77
    %s81 = scalar_lea.vmem [#allocation0], 3
    %v82 = vld [vmem:[%s81] ss:$8 sm:$0xf]
    %s83 = scalar_lea.vmem [#allocation0], 3
    %v84 = vld [vmem:[%s83] ss:$8 sm:$0xf0]
    %vm85 = vcmask 1047556
    %v86 = vsel %vm85, %v84, %v82
    %87 = vrot.lane.b32.xlu0 %v86, 48
    %v88 = vpop.permute.xlu0 %87
    %vm89 = vcmask 523648
    %90 = vst.msk [vmem:[%s1] sm:$0xff] %vm89, %v88
    %s91 = scalar_lea.vmem [#allocation0], 67
    %v92 = vld [vmem:[%s91] ss:$8 sm:$0xf]
    %s93 = scalar_lea.vmem [#allocation0], 67
    %v94 = vld [vmem:[%s93] ss:$8 sm:$0xf0]
    %vm95 = vcmask 1047556
    %v96 = vsel %vm95, %v94, %v92
    %97 = vrot.lane.b32.xlu0 %v96, 48
    %v98 = vpop.permute.xlu0 %97
    %vm99 = vcmask 523648
    %s100 = scalar_lea.vmem %s1, 8
    %101 = vst.msk [vmem:[%s100] sm:$0xff] %vm99, %v98
    %s102 = scalar_lea.vmem [#allocation0], 2
    %v103 = vld [vmem:[%s102] ss:$8 sm:$0xf]
    %s104 = scalar_lea.vmem [#allocation0], 2
    %v105 = vld [vmem:[%s104] ss:$8 sm:$0xf0]
    %vm106 = vcmask 1047556
    %v107 = vsel %vm106, %v105, %v103
    %108 = vrot.lane.b32.xlu0 %v107, 32
    %v109 = vpop.permute.xlu0 %108
    %vm110 = vcmask 392448
    %111 = vst.msk [vmem:[%s1] sm:$0xff] %vm110, %v109
    %s112 = scalar_lea.vmem [#allocation0], 66
    %v113 = vld [vmem:[%s112] ss:$8 sm:$0xf]
    %s114 = scalar_lea.vmem [#allocation0], 66
    %v115 = vld [vmem:[%s114] ss:$8 sm:$0xf0]
    %vm116 = vcmask 1047556
    %v117 = vsel %vm116, %v115, %v113
    %118 = vrot.lane.b32.xlu0 %v117, 32
    %v119 = vpop.permute.xlu0 %118
    %vm120 = vcmask 392448
    %s121 = scalar_lea.vmem %s1, 8
    %122 = vst.msk [vmem:[%s121] sm:$0xff] %vm120, %v119
    %s123 = scalar_lea.vmem [#allocation0], 1
    %v124 = vld [vmem:[%s123] ss:$8 sm:$0xf]
    %s125 = scalar_lea.vmem [#allocation0], 1
    %v126 = vld [vmem:[%s125] ss:$8 sm:$0xf0]
    %vm127 = vcmask 1047556
    %v128 = vsel %vm127, %v126, %v124
    %129 = vrot.lane.b32.xlu0 %v128, 16
    %v130 = vpop.permute.xlu0 %129
    %vm131 = vcmask 261248
    %132 = vst.msk [vmem:[%s1] sm:$0xff] %vm131, %v130
    %s133 = scalar_lea.vmem [#allocation0], 65
    %v134 = vld [vmem:[%s133] ss:$8 sm:$0xf]
    %s135 = scalar_lea.vmem [#allocation0], 65
    %v136 = vld [vmem:[%s135] ss:$8 sm:$0xf0]
    %vm137 = vcmask 1047556
    %v138 = vsel %vm137, %v136, %v134
    %139 = vrot.lane.b32.xlu0 %v138, 16
    %v140 = vpop.permute.xlu0 %139
    %vm141 = vcmask 261248
    %s142 = scalar_lea.vmem %s1, 8
    %143 = vst.msk [vmem:[%s142] sm:$0xff] %vm141, %v140

// kernel: tile.29
$region0: #{tile.29}
  #allocation0 [shape = 's32[1]{0}', space=sflag, size = 0x4, scoped, tag = 'scoped memory for tile.29']
  %s0 = inlined_call_operand.vmem [shape: f32[16], index: 0, kind: input, shape index: {}]
  %s1 = inlined_call_operand.vmem [shape: f32[4,16], index: 1, kind: output, shape index: {}]
  // Predicated region
  $region2: #{tile.29} parent=0 // pred_check
    _
  $region3: #{tile.29} parent=0 // pred_check_branch
    %3 = sbr.rel (0) target = $region5
  $region4: #{tile.29} parent=0 // pred_region
    _
  $region5: #{tile.29} parent=0 // pred_fallthru
    _
  %v4 = vld [vmem:[%s0] ss:$0 sm:$0xff]
  %5 = vst [vmem:[%s1] sm:$0xf] %v4

// kernel: tile.30
$region0: #{tile.30}
  %s0 = inlined_call_operand.vmem [shape: f32[4,16], index: 0, kind: input, shape index: {}]
  %s1 = inlined_call_operand.vmem [shape: f32[1,64], index: 1, kind: output, shape index: {}]
  $region1: #{tile.30} parent=0
    #allocation0 [shape = 'u8[4096]{0}', space=vmem, size = 0x1000, scoped, tag = 'scoped mem for output reshape']
    #allocation1 [shape = 'u8[4096]{0}', space=vmem, size = 0x1000, scoped, tag = 'scoped mem for input reshape']
    %s3 = ssub.s32 16, 1
    %v4 = vld [vmem:[%s0] sm:%s3]
    %5 = vst [vmem:[#allocation1] sm:%s3] %v4
    %v6 = vld [vmem:[#allocation1] sm:$0x1]
    %vm7 = vcmask 130048
    %8 = vst.msk [vmem:[#allocation0] sm:$0x1] %vm7, %v6
    %s9 = scalar_lea.vmem [#allocation1], 3
    %v10 = vld [vmem:[%s9] sm:$0x1]
    %11 = vrot.lane.b32.xlu0 %v10, 48
    %v12 = vpop.permute.xlu0 %11
    %vm13 = vcmask 523648
    %14 = vst.msk [vmem:[#allocation0] sm:$0x1] %vm13, %v12
    %s15 = scalar_lea.vmem [#allocation1], 2
    %v16 = vld [vmem:[%s15] sm:$0x1]
    %17 = vrot.lane.b32.xlu0 %v16, 32
    %v18 = vpop.permute.xlu0 %17
    %vm19 = vcmask 392448
    %20 = vst.msk [vmem:[#allocation0] sm:$0x1] %vm19, %v18
    %s21 = scalar_lea.vmem [#allocation1], 1
    %v22 = vld [vmem:[%s21] sm:$0x1]
    %23 = vrot.lane.b32.xlu0 %v22, 16
    %v24 = vpop.permute.xlu0 %23
    %vm25 = vcmask 261248
    %26 = vst.msk [vmem:[#allocation0] sm:$0x1] %vm25, %v24
    %s28 = ssub.s32 2, 1
    %v29 = vld [vmem:[#allocation0] sm:%s28]
    %s31 = ssub.s32 2, 1
    %32 = vst [vmem:[%s1] sm:%s31] %v29

// kernel: tile.34
$region0: #{tile.34}
  #allocation0 [shape = 's32[1]{0}', space=sflag, size = 0x4, scoped, tag = 'scoped memory for tile.34']
  %s0 = inlined_call_operand.vmem [shape: f32[16], index: 0, kind: input, shape index: {}]
  %s1 = inlined_call_operand.vmem [shape: f32[2,16], index: 1, kind: output, shape index: {}]
  // Predicated region
  $region2: #{tile.34} parent=0 // pred_check
    _
  $region3: #{tile.34} parent=0 // pred_check_branch
    %3 = sbr.rel (0) target = $region5
  $region4: #{tile.34} parent=0 // pred_region
    _
  $region5: #{tile.34} parent=0 // pred_fallthru
    _
  %v4 = vld [vmem:[%s0] ss:$0 sm:$0xff]
  %5 = vst [vmem:[%s1] sm:$0x3] %v4

// kernel: tile.35
$region0: #{tile.35}
  %s0 = inlined_call_operand.vmem [shape: f32[2,16], index: 0, kind: input, shape index: {}]
  %s1 = inlined_call_operand.vmem [shape: f32[1,32], index: 1, kind: output, shape index: {}]
  $region1: #{tile.35} parent=0
    #allocation0 [shape = 'u8[4096]{0}', space=vmem, size = 0x1000, scoped, tag = 'scoped mem for output reshape']
    #allocation1 [shape = 'u8[4096]{0}', space=vmem, size = 0x1000, scoped, tag = 'scoped mem for input reshape']
    %s3 = ssub.s32 4, 1
    %v4 = vld [vmem:[%s0] sm:%s3]
    %5 = vst [vmem:[#allocation1] sm:%s3] %v4
    %v6 = vld [vmem:[#allocation1] sm:$0x1]
    %vm7 = vcmask 130048
    %8 = vst.msk [vmem:[#allocation0] sm:$0x1] %vm7, %v6
    %s9 = scalar_lea.vmem [#allocation1], 1
    %v10 = vld [vmem:[%s9] sm:$0x1]
    %11 = vrot.lane.b32.xlu0 %v10, 16
    %v12 = vpop.permute.xlu0 %11
    %vm13 = vcmask 261248
    %14 = vst.msk [vmem:[#allocation0] sm:$0x1] %vm13, %v12
    %s16 = ssub.s32 2, 1
    %v17 = vld [vmem:[#allocation0] sm:%s16]
    %s19 = ssub.s32 2, 1
    %20 = vst [vmem:[%s1] sm:%s19] %v17

// kernel: decoder_layer_forward.3
$region0: #{decoder_layer_forward.3}
  #allocation0 [shape = 'u32[]', space=smem, size = 0x4, offset = 0x4, fixed_abs, tag = 'smem constant byte address 0x4 - core index']
  #allocation1 [shape = 'u32[72,128]{1,0:T(1,128)}', space=vmem, size = 0x9000, scoped, tag = 'internal scratch']
  #allocation2 [shape = 's32[1]{0}', space=sflag, size = 0x4, scoped, tag = 'scoped memory for decoder_layer_forward.3']
  #allocation3 [shape = 'u8[512]{0}', space=smem, size = 0x200, scoped, tag = 'prefetched SMEM operand 0']
  #allocation4 [shape = 'u8[512]{0}', space=smem, size = 0x200, scoped, tag = 'prefetched SMEM operand 1']
  %s0 = inlined_call_operand.vmem [shape: s32[4], index: 0, kind: input, shape index: {}]
  %s1 = inlined_call_operand.vmem [shape: s32[4], index: 1, kind: input, shape index: {}]
  %s2 = inlined_call_operand.vmem [shape: f32[16,68], index: 2, kind: input, shape index: {}]
  %s3 = inlined_call_operand.vmem [shape: f32[16,4], index: 3, kind: input, shape index: {}]
  %s4 = inlined_call_operand.vmem [shape: bf16[4,32,64], index: 4, kind: input, shape index: {}]
  %s5 = inlined_call_operand.vmem [shape: bf16[4,32,64], index: 5, kind: input, shape index: {}]
  %s6 = inlined_call_operand.vmem [shape: bf16[4,64,32], index: 6, kind: input, shape index: {}]
  %s7 = inlined_call_operand.hbm [shape: f32[16,32], index: 7, kind: output, shape index: {}]
  %s8 = sld [smem:[#allocation0]]
  $region61: #{decoder_layer_forward.3} parent=0
    _
  %s10 = ssub.s32 1, %s8
  %s11 = scalar_select 0, %s10, %s8
  %s13 = sshll.u32 %s0, 4
  %s14 = int_to_ptr.vmem [resolvable:$true] %s13
  %16 = dma.vmem_to_smem %s14, 16, [#allocation3], [#allocation2]
  %s18 = sshll.u32 %s1, 4
  %s19 = int_to_ptr.vmem [resolvable:$true] %s18
  %21 = dma.vmem_to_smem %s19, 16, [#allocation4], [#allocation2]
  %23 = dma.done [#allocation2], 32
  %24 = sfence
  $region1: #{decoder_layer_forward.3} parent=0
    #allocation5 [shape = 'u8[8192]{0}', space=vmem, size = 0x2000, scoped, tag = 'output window, operand 0, single buffered']
    #allocation6 [shape = 's32[2]{0}', space=sflag, size = 0x8, scoped, tag = 'scoped memory for decoder_layer_forward.3']
    %25 = vsyncpa [#allocation6], 0
    loop: start=0, step=1, limit=6
    $region2: #{decoder_layer_forward.3} parent=1 // loop_pre_header
      _
    $region3: #{decoder_layer_forward.3} parent=1 // loop_header
      %s27 = sphi 0, %s31
      %p28 = scmp.ge.s32.totalorder %s27, 6
      %s35 = sphi 0, %s35
      %s37 = sphi 0, %s35
      %s38 = sphi 0, %s37
      %s52 = sphi 0, %s38
      %s56 = sphi 0, %s56
      %s58 = sphi 0, %s56
      %s59 = sphi 0, %s58
      %s73 = sphi 0, %s59
      %s81 = sphi 0, %s83
      %s84 = sphi 0, %s81
      %s85 = sphi 0, %s84
      %s101 = sphi 0, %s85
      %s109 = sphi 0, %s111
      %s112 = sphi 0, %s109
      %s113 = sphi 0, %s112
      %s129 = sphi 0, %s113
      %s137 = sphi 0, %s139
      %s140 = sphi 0, %s137
      %s141 = sphi 0, %s140
      %s157 = sphi 0, %s141
      %s161 = sphi 0, %s161
      %s163 = sphi 0, %s161
      %s164 = sphi 0, %s163
      %s178 = sphi 0, %s164
    $region4: #{decoder_layer_forward.3} parent=1 // loop_header_branch
      %30 = sbr.rel (%p28) target = $region8
    $region5: #{decoder_layer_forward.3} parent=1 // loop_body
      %s32 = ssub.s32 %s27, 1
      %s33 = ssub.s32 %s27, 2
      %s34 = sadd.s32 %s27, 1
      %s36 = sadd.s32 %s35, 1
      %p39 = scmp.eq.s32.totalorder %s27, 3
      %p40 = scmp.ne.s32.totalorder %s35, %s37
      %p41 = scmp.eq.s32.totalorder %s27, 0
      %p42 = por %p40, %p41
      %p43 = scmp.ne.s32.totalorder %s35, %s37
      %p44 = scmp.eq.s32.totalorder %s32, 3
      %p45 = por %p43, %p44
      %p46 = scmp.ne.s32.totalorder %s37, %s38
      %p47 = scmp.eq.s32.totalorder %s32, 0
      %p48 = por %p46, %p47
      %p49 = scmp.ne.s32.totalorder %s37, %s38
      %p50 = scmp.eq.s32.totalorder %s33, 3
      %p51 = por %p49, %p50
      %p53 = scmp.ne.s32.totalorder %s38, %s52
      %p54 = scmp.eq.s32.totalorder %s33, 0
      %p55 = por %p53, %p54
      %s57 = sadd.s32 %s56, 1
      %p60 = scmp.eq.s32.totalorder %s27, 3
      %p61 = scmp.ne.s32.totalorder %s56, %s58
      %p62 = scmp.eq.s32.totalorder %s27, 0
      %p63 = por %p61, %p62
      %p64 = scmp.ne.s32.totalorder %s56, %s58
      %p65 = scmp.eq.s32.totalorder %s32, 3
      %p66 = por %p64, %p65
      %p67 = scmp.ne.s32.totalorder %s58, %s59
      %p68 = scmp.eq.s32.totalorder %s32, 0
      %p69 = por %p67, %p68
      %p70 = scmp.ne.s32.totalorder %s58, %s59
      %p71 = scmp.eq.s32.totalorder %s33, 3
      %p72 = por %p70, %p71
      %p74 = scmp.ne.s32.totalorder %s59, %s73
      %p75 = scmp.eq.s32.totalorder %s33, 0
      %p76 = por %p74, %p75
      %s77 = sld [smem:[#allocation4 + %s27]]
      %s78 = sld [smem:[#allocation4 + %s34]]
      %s79 = ssub.s32 %s77, %s78
      %p80 = scmp.eq.s32.totalorder %s79, 0
      %s82 = sadd.s32 %s81, 1
      %s83 = scalar_select %p80, %s81, %s82
      %p86 = pneg %p80
      %p87 = scmp.eq.s32.totalorder %s27, 3
      %p88 = por %p86, %p87
      %p89 = scmp.ne.s32.totalorder %s81, %s84
      %p90 = scmp.eq.s32.totalorder %s27, 0
      %p91 = por %p89, %p90
      %p92 = scmp.ne.s32.totalorder %s81, %s84
      %p93 = scmp.eq.s32.totalorder %s32, 3
      %p94 = por %p92, %p93
      %p95 = scmp.ne.s32.totalorder %s84, %s85
      %p96 = scmp.eq.s32.totalorder %s32, 0
      %p97 = por %p95, %p96
      %p98 = scmp.ne.s32.totalorder %s84, %s85
      %p99 = scmp.eq.s32.totalorder %s33, 3
      %p100 = por %p98, %p99
      %p102 = scmp.ne.s32.totalorder %s85, %s101
      %p103 = scmp.eq.s32.totalorder %s33, 0
      %p104 = por %p102, %p103
      %s105 = sld [smem:[#allocation4 + %s27]]
      %s106 = sld [smem:[#allocation4 + %s34]]
      %s107 = ssub.s32 %s105, %s106
      %p108 = scmp.eq.s32.totalorder %s107, 0
      %s110 = sadd.s32 %s109, 1
      %s111 = scalar_select %p108, %s109, %s110
      %p114 = pneg %p108
      %p115 = scmp.eq.s32.totalorder %s27, 3
      %p116 = por %p114, %p115
      %p117 = scmp.ne.s32.totalorder %s109, %s112
      %p118 = scmp.eq.s32.totalorder %s27, 0
      %p119 = por %p117, %p118
      %p120 = scmp.ne.s32.totalorder %s109, %s112
      %p121 = scmp.eq.s32.totalorder %s32, 3
      %p122 = por %p120, %p121
      %p123 = scmp.ne.s32.totalorder %s112, %s113
      %p124 = scmp.eq.s32.totalorder %s32, 0
      %p125 = por %p123, %p124
      %p126 = scmp.ne.s32.totalorder %s112, %s113
      %p127 = scmp.eq.s32.totalorder %s33, 3
      %p128 = por %p126, %p127
      %p130 = scmp.ne.s32.totalorder %s113, %s129
      %p131 = scmp.eq.s32.totalorder %s33, 0
      %p132 = por %p130, %p131
      %s133 = sld [smem:[#allocation4 + %s27]]
      %s134 = sld [smem:[#allocation4 + %s34]]
      %s135 = ssub.s32 %s133, %s134
      %p136 = scmp.eq.s32.totalorder %s135, 0
      %s138 = sadd.s32 %s137, 1
      %s139 = scalar_select %p136, %s137, %s138
      %p142 = pneg %p136
      %p143 = scmp.eq.s32.totalorder %s27, 3
      %p144 = por %p142, %p143
      %p145 = scmp.ne.s32.totalorder %s137, %s140
      %p146 = scmp.eq.s32.totalorder %s27, 0
      %p147 = por %p145, %p146
      %p148 = scmp.ne.s32.totalorder %s137, %s140
      %p149 = scmp.eq.s32.totalorder %s32, 3
      %p150 = por %p148, %p149
      %p151 = scmp.ne.s32.totalorder %s140, %s141
      %p152 = scmp.eq.s32.totalorder %s32, 0
      %p153 = por %p151, %p152
      %p154 = scmp.ne.s32.totalorder %s140, %s141
      %p155 = scmp.eq.s32.totalorder %s33, 3
      %p156 = por %p154, %p155
      %p158 = scmp.ne.s32.totalorder %s141, %s157
      %p159 = scmp.eq.s32.totalorder %s33, 0
      %p160 = por %p158, %p159
      %s162 = sadd.s32 %s161, 1
      %p165 = scmp.eq.s32.totalorder %s27, 3
      %p166 = scmp.ne.s32.totalorder %s161, %s163
      %p167 = scmp.eq.s32.totalorder %s27, 0
      %p168 = por %p166, %p167
      %p169 = scmp.ne.s32.totalorder %s161, %s163
      %p170 = scmp.eq.s32.totalorder %s32, 3
      %p171 = por %p169, %p170
      %p172 = scmp.ne.s32.totalorder %s163, %s164
      %p173 = scmp.eq.s32.totalorder %s32, 0
      %p174 = por %p172, %p173
      %p175 = scmp.ne.s32.totalorder %s163, %s164
      %p176 = scmp.eq.s32.totalorder %s33, 3
      %p177 = por %p175, %p176
      %p179 = scmp.ne.s32.totalorder %s164, %s178
      %p180 = scmp.eq.s32.totalorder %s33, 0
      %p181 = por %p179, %p180
      %p182 = scmp.le.s32.totalorder 1, %s27
      %p183 = scmp.lt.s32.totalorder %s27, 5
      %p184 = pnand %p182, %p183
      %p185 = pneg %p184
      // Predicated region
      $region9: #{decoder_layer_forward.3} parent=5 // pred_check
        _
      $region10: #{decoder_layer_forward.3} parent=5 // pred_check_branch
        %187 = sbr.rel (%p184) target = $region12
      $region11: #{decoder_layer_forward.3} parent=5 // pred_region
        %s188 = ssub.s32 %s27, 1
        // Predicated region
        $region13: #{decoder_layer_forward.3} parent=11 // pred_check
          %p189 = pneg %p48
        $region14: #{decoder_layer_forward.3} parent=11 // pred_check_branch
          %191 = sbr.rel (%p189) target = $region16
        $region15: #{decoder_layer_forward.3} parent=11 // pred_region
          _
        $region16: #{decoder_layer_forward.3} parent=11 // pred_fallthru
          _
        // Predicated region
        $region17: #{decoder_layer_forward.3} parent=11 // pred_check
          %p192 = pneg %p69
        $region18: #{decoder_layer_forward.3} parent=11 // pred_check_branch
          %194 = sbr.rel (%p192) target = $region20
        $region19: #{decoder_layer_forward.3} parent=11 // pred_region
          _
        $region20: #{decoder_layer_forward.3} parent=11 // pred_fallthru
          _
      $region12: #{decoder_layer_forward.3} parent=5 // pred_fallthru
        _
      %p195 = scmp.lt.s32.totalorder %s27, 4
      // Predicated region
      $region21: #{decoder_layer_forward.3} parent=5 // pred_check
        %p196 = pneg %p195
      $region22: #{decoder_layer_forward.3} parent=5 // pred_check_branch
        %198 = sbr.rel (%p196) target = $region24
      $region23: #{decoder_layer_forward.3} parent=5 // pred_region
        // Predicated region
        $region25: #{decoder_layer_forward.3} parent=23 // pred_check
          %p199 = pneg %p91
        $region26: #{decoder_layer_forward.3} parent=23 // pred_check_branch
          %201 = sbr.rel (%p199) target = $region28
        $region27: #{decoder_layer_forward.3} parent=23 // pred_region
          %s202 = sld [smem:[#allocation4 + %s27]]
          %p203 = scmp.lt.s32.totalorder %s202, 3
          %s204 = scalar_select %p203, %s202, 3
          %s205 = smul.addr %s204, 4
          %s206 = smul.addr %s205, 4
          %s207 = scalar_lea.vmem %s4, %s206
          %s208 = sld [smem:[#allocation4 + %s27]]
        $region28: #{decoder_layer_forward.3} parent=23 // pred_fallthru
          _
        // Predicated region
        $region29: #{decoder_layer_forward.3} parent=23 // pred_check
          %p209 = pneg %p119
        $region30: #{decoder_layer_forward.3} parent=23 // pred_check_branch
          %211 = sbr.rel (%p209) target = $region32
        $region31: #{decoder_layer_forward.3} parent=23 // pred_region
          %s212 = sld [smem:[#allocation4 + %s27]]
          %p213 = scmp.lt.s32.totalorder %s212, 3
          %s214 = scalar_select %p213, %s212, 3
          %s215 = smul.addr %s214, 4
          %s216 = smul.addr %s215, 4
          %s217 = scalar_lea.vmem %s5, %s216
          %s218 = sld [smem:[#allocation4 + %s27]]
        $region32: #{decoder_layer_forward.3} parent=23 // pred_fallthru
          _
        // Predicated region
        $region33: #{decoder_layer_forward.3} parent=23 // pred_check
          %p219 = pneg %p147
        $region34: #{decoder_layer_forward.3} parent=23 // pred_check_branch
          %221 = sbr.rel (%p219) target = $region36
        $region35: #{decoder_layer_forward.3} parent=23 // pred_region
          %s222 = sld [smem:[#allocation4 + %s27]]
          %p223 = scmp.lt.s32.totalorder %s222, 3
          %s224 = scalar_select %p223, %s222, 3
          %s225 = smul.addr %s224, 8
          %s226 = smul.addr %s225, 4
          %s227 = scalar_lea.vmem %s6, %s226
          %s228 = sld [smem:[#allocation4 + %s27]]
        $region36: #{decoder_layer_forward.3} parent=23 // pred_fallthru
          _
      $region24: #{decoder_layer_forward.3} parent=5 // pred_fallthru
        _
      %p229 = scmp.le.s32.totalorder 1, %s27
      %p230 = scmp.lt.s32.totalorder %s27, 5
      %p231 = pnand %p229, %p230
      %p232 = pneg %p231
      // Predicated region
      $region37: #{decoder_layer_forward.3} parent=5 // pred_check
        _
      $region38: #{decoder_layer_forward.3} parent=5 // pred_check_branch
        %234 = sbr.rel (%p231) target = $region40
      $region39: #{decoder_layer_forward.3} parent=5 // pred_region
        %s235 = ssub.s32 %s27, 1
        %p236 = pneg %p48
        %p237 = pneg %p45
        %p238 = pneg %p69
        %p239 = pneg %p66
        %s240 = sld [smem:[#allocation4 + %s32]]
        %p241 = scmp.lt.s32.totalorder %s240, 3
        %s242 = scalar_select %p241, %s240, 3
        %s243 = smul.addr %s242, 4
        %s244 = smul.addr %s243, 4
        %s245 = scalar_lea.vmem %s4, %s244
        %p246 = pneg %p97
        %p247 = pneg %p94
        %s248 = sld [smem:[#allocation4 + %s32]]
        %p249 = scmp.lt.s32.totalorder %s248, 3
        %s250 = scalar_select %p249, %s248, 3
        %s251 = smul.addr %s250, 4
        %s252 = smul.addr %s251, 4
        %s253 = scalar_lea.vmem %s5, %s252
        %p254 = pneg %p125
        %p255 = pneg %p122
        %s256 = sld [smem:[#allocation4 + %s32]]
        %p257 = scmp.lt.s32.totalorder %s256, 3
        %s258 = scalar_select %p257, %s256, 3
        %s259 = smul.addr %s258, 8
        %s260 = smul.addr %s259, 4
        %s261 = scalar_lea.vmem %s6, %s260
        %p262 = pneg %p153
        %p263 = pneg %p150
        %p264 = pneg %p174
        %p265 = pneg %p171
        %s266 = sld [smem:[#allocation4 + %s32]]
        %p267 = scmp.lt.s32.totalorder %s266, 3
        %s268 = scalar_select %p267, %s266, 3
        %s269 = smul.addr %s268, 4
        %s270 = smul.addr %s269, 4
        %s271 = scalar_lea.vmem %s4, %s270
        %s272 = sld [smem:[#allocation4 + %s32]]
        %s273 = sld [smem:[#allocation4 + %s32]]
        %p274 = scmp.lt.s32.totalorder %s273, 3
        %s275 = scalar_select %p274, %s273, 3
        %s276 = smul.addr %s275, 4
        %s277 = smul.addr %s276, 4
        %s278 = scalar_lea.vmem %s5, %s277
        %s279 = sld [smem:[#allocation4 + %s32]]
        %s280 = sld [smem:[#allocation4 + %s32]]
        %p281 = scmp.lt.s32.totalorder %s280, 3
        %s282 = scalar_select %p281, %s280, 3
        %s283 = smul.addr %s282, 8
        %s284 = smul.addr %s283, 4
        %s285 = scalar_lea.vmem %s6, %s284
        %s286 = sld [smem:[#allocation4 + %s32]]
        %p288 = scmp.eq.s32.totalorder %s32, 0
        // Predicated region
        $region41: #{decoder_layer_forward.3} parent=39 // pred_check
          %p289 = pneg %p288
        $region42: #{decoder_layer_forward.3} parent=39 // pred_check_branch
          %291 = sbr.rel (%p289) target = $region44
        $region43: #{decoder_layer_forward.3} parent=39 // pred_region
          %v292 = vld [vmem:[%s2] sm:$0xff]
          %v293 = vld [vmem:[%s2 + $0x8] sm:$0xff]
          %vm294 = vcmask 261120
          %295 = vst.msk [vmem:[#allocation5] sm:$0xff] %vm294, %v292
          %296 = vst.msk [vmem:[#allocation5 + $0x8] sm:$0xff] %vm294, %v293
        $region44: #{decoder_layer_forward.3} parent=39 // pred_fallthru
          _
        %s297 = sld [smem:[#allocation3 + %s32]]
        %p298 = scmp.gt.s32.totalorder %s297, 0
        // Predicated region
        $region45: #{decoder_layer_forward.3} parent=39 // pred_check
          %p299 = pneg %p298
        $region46: #{decoder_layer_forward.3} parent=39 // pred_check_branch
          %301 = sbr.rel (%p299) target = $region48
        $region47: #{decoder_layer_forward.3} parent=39 // pred_region
          %v302 = vld [vmem:[%s2] sm:$0xff]
          %v303 = vld [vmem:[%s2 + $0x8] sm:$0xff]
          %v304 = vlaneseq
          %v305 = vand.u32 %v304, 127
          %v306 = vstv %s32
          %vm307 = vcmp.eq.s32.totalorder %v305, %v306
          %v308 = vld [vmem:[%s3] sm:$0xff]
          %v309 = vld [vmem:[%s3 + $0x8] sm:$0xff]
          %v310 = vsel %vm307, %v308, 0.0
          %v311 = vsel %vm307, %v309, 0.0
          %vm312 = vcmask 31744
          %v313 = vsel %vm312, %v310, 0.0
          %314 = vadd.xlane.f32.xlu0 %v313
          %v315 = vpop.xlane.xlu0 %314
          %v316 = vsel %vm312, %v311, 0.0
          %317 = vadd.xlane.f32.xlu0 %v316
          %v318 = vpop.xlane.xlu0 %317
          %v319 = vpack.c.bf16 %v303, %v302
          %v320 = vld [vmem:[%s271] sm:$0xf]
          %v321 = vld [vmem:[%s271 + $0x4] sm:$0xf]
          %v322 = vld [vmem:[%s271 + $0x8] sm:$0xf]
          %v323 = vld [vmem:[%s271 + $0xc] sm:$0xf]
          %325 = vrot.lane.b32.xlu0 %v319, 96
          %v326 = vpop.permute.xlu0 %325
          %v331 = vunpack.c.l.b16 %v320
          %v332 = vunpack.c.l.b16 %v321
          %v333 = vunpack.c.l.b16 %v322
          %v334 = vunpack.c.l.b16 %v323
          %v335 = vpack.c.b16 %v332, %v331
          %v336 = vpack.c.b16 %v334, %v333
          %vm339 = vcmask 261120
          %v341 = vsel %vm339, %v326, 0
          %343 = vmatpush.bf16.msra.mxu0 0
          %344 = vmatpush.bf16.msra.mxu0 0
          %345 = vmatpush.bf16.msra.mxu0 0
          %346 = vmatpush.bf16.msra.mxu0 0
          %347 = vmatpush.bf16.msra.mxu0 0
          %348 = vmatpush.bf16.msra.mxu0 0
          %349 = vmatpush.bf16.msra.mxu0 %v336
          %350 = vmatpush.bf16.msra.mxu0 %v335
          %351 = vmatmul.bf16.gmra.mxu0 %v341
          %v352 = vpop.f32.mrf.mxu0
          %v353 = vadd.f32 0.0, %v352
          %v354 = vpop.f32.mrf.mxu0
          %v355 = vadd.f32 0.0, %v354
          %356 = vdwg.mxu0
          %v357 = vld [vmem:[%s278] sm:$0xf]
          %v358 = vld [vmem:[%s278 + $0x4] sm:$0xf]
          %v359 = vld [vmem:[%s278 + $0x8] sm:$0xf]
          %v360 = vld [vmem:[%s278 + $0xc] sm:$0xf]
          %v365 = vunpack.c.l.b16 %v357
          %v366 = vunpack.c.l.b16 %v358
          %v367 = vunpack.c.l.b16 %v359
          %v368 = vunpack.c.l.b16 %v360
          %v369 = vpack.c.b16 %v366, %v365
          %v370 = vpack.c.b16 %v368, %v367
          %373 = vmatpush.bf16.msra.mxu0 0
          %374 = vmatpush.bf16.msra.mxu0 0
          %375 = vmatpush.bf16.msra.mxu0 0
          %376 = vmatpush.bf16.msra.mxu0 0
          %377 = vmatpush.bf16.msra.mxu0 0
          %378 = vmatpush.bf16.msra.mxu0 0
          %379 = vmatpush.bf16.msra.mxu0 %v370
          %380 = vmatpush.bf16.msra.mxu0 %v369
          %381 = vmatmul.bf16.gmra.mxu0 %v341
          %v382 = vpop.f32.mrf.mxu0
          %v383 = vadd.f32 0.0, %v382
          %v384 = vpop.f32.mrf.mxu0
          %v385 = vadd.f32 0.0, %v384
          %386 = vdwg.mxu0
          %v387 = vxor.u32 %v353, 2147483648
          %v388 = vxor.u32 %v355, 2147483648
          %v389 = vmul.f32 %v387, 1.442695
          %v390 = vpow.pop %v389
          %v391 = vmul.f32 %v388, 1.442695
          %v392 = vpow.pop %v391
          %v393 = vadd.f32 %v390, 1.0
          %v394 = vadd.f32 %v392, 1.0
          %v395 = vrcp.pop %v393
          %v396 = vmul.f32 %v393, %v395
          %v397 = vsub.f32 1.0, %v396
          %v398 = vmul.f32 %v395, %v397
          %v399 = vadd.f32 %v395, %v398
          %vm400 = vweird.f32 %v393
          %vm401 = vweird.f32 %v395
          %vm402 = vmor %vm400, %vm401
          %v403 = vsel %vm402, %v395, %v399
          %v404 = vand.u32 2147483647, %v393
          %vm405 = vcmp.eq.f32.partialorder %v404, 8.507059e+37
          %v406 = vand.u32 %v393, 2147483648
          %v407 = vor.u32 1.1754944e-38, %v406
          %v408 = vsel %vm405, %v407, %v403
          %v409 = vmul.f32 1.0, %v408
          %v410 = vrcp.pop %v394
          %v411 = vmul.f32 %v394, %v410
          %v412 = vsub.f32 1.0, %v411
          %v413 = vmul.f32 %v410, %v412
          %v414 = vadd.f32 %v410, %v413
          %vm415 = vweird.f32 %v394
          %vm416 = vweird.f32 %v410
          %vm417 = vmor %vm415, %vm416
          %v418 = vsel %vm417, %v410, %v414
          %v419 = vand.u32 2147483647, %v394
          %vm420 = vcmp.eq.f32.partialorder %v419, 8.507059e+37
          %v421 = vand.u32 %v394, 2147483648
          %v422 = vor.u32 1.1754944e-38, %v421
          %v423 = vsel %vm420, %v422, %v418
          %v424 = vmul.f32 1.0, %v423
          %v425 = vmul.f32 %v353, %v409
          %v426 = vmul.f32 %v355, %v424
          %v427 = vmul.f32 %v425, %v383
          %v428 = vmul.f32 %v426, %v385
          %v429 = vpack.c.bf16 %v428, %v427
          %v430 = vld [vmem:[%s285] sm:$0xf]
          %v431 = vld [vmem:[%s285 + $0x4] sm:$0xf]
          %v432 = vld [vmem:[%s285 + $0x8] sm:$0xf]
          %v433 = vld [vmem:[%s285 + $0xc] sm:$0xf]
          %v434 = vld [vmem:[%s285 + $0x10] sm:$0xf]
          %v435 = vld [vmem:[%s285 + $0x14] sm:$0xf]
          %v436 = vld [vmem:[%s285 + $0x18] sm:$0xf]
          %v437 = vld [vmem:[%s285 + $0x1c] sm:$0xf]
          %v446 = vunpack.c.l.b16 %v430
          %v447 = vunpack.c.l.b16 %v431
          %v448 = vunpack.c.l.b16 %v432
          %v449 = vunpack.c.l.b16 %v433
          %v450 = vunpack.c.l.b16 %v434
          %v451 = vunpack.c.l.b16 %v435
          %v452 = vunpack.c.l.b16 %v436
          %v453 = vunpack.c.l.b16 %v437
          %v454 = vpack.c.b16 %v447, %v446
          %v455 = vpack.c.b16 %v449, %v448
          %v456 = vpack.c.b16 %v451, %v450
          %v457 = vpack.c.b16 %v453, %v452
          %vm462 = vcmask 523264
          %v464 = vsel %vm462, %v429, 0
          %466 = vmatpush.bf16.msra.mxu0 0
          %467 = vmatpush.bf16.msra.mxu0 0
          %468 = vmatpush.bf16.msra.mxu0 0
          %469 = vmatpush.bf16.msra.mxu0 0
          %470 = vmatpush.bf16.msra.mxu0 %v457
          %471 = vmatpush.bf16.msra.mxu0 %v456
          %472 = vmatpush.bf16.msra.mxu0 %v455
          %473 = vmatpush.bf16.msra.mxu0 %v454
          %474 = vmatmul.bf16.gmra.mxu0 %v464
          %v475 = vpop.f32.mrf.mxu0
          %v476 = vadd.f32 0.0, %v475
          %v477 = vpop.f32.mrf.mxu0
          %v478 = vadd.f32 0.0, %v477
          %479 = vdwg.mxu0
          %v480 = vld [vmem:[#allocation5] sm:$0xff]
          %v481 = vld [vmem:[#allocation5 + $0x8] sm:$0xff]
          %v482 = vmul.f32 %v315, %v476
          %v483 = vmul.f32 %v318, %v478
          %v484 = vadd.f32 %v480, %v482
          %v485 = vadd.f32 %v481, %v483
          %486 = vst.msk [vmem:[#allocation5] sm:$0xff] %vm339, %v484
          %487 = vst.msk [vmem:[#allocation5 + $0x8] sm:$0xff] %vm339, %v485
        $region48: #{decoder_layer_forward.3} parent=39 // pred_fallthru
          _
        // Predicated region
        $region49: #{decoder_layer_forward.3} parent=39 // pred_check
          %p488 = pneg %p171
        $region50: #{decoder_layer_forward.3} parent=39 // pred_check_branch
          %490 = sbr.rel (%p488) target = $region52
        $region51: #{decoder_layer_forward.3} parent=39 // pred_region
          %492 = vsyncadd [#allocation6], 0
          %s493 = sshll.u32 [#allocation5], 4
          %s494 = int_to_ptr.vmem [resolvable:$true] %s493
          %s495 = sshll.u32 %s7, 4
          %s496 = int_to_ptr.hbm [resolvable:$true] %s495
          %501 = dma.vmem_to_hbm [thread:$0]  %s494, 256, %s496, [#allocation6], 128, 128, 8
        $region52: #{decoder_layer_forward.3} parent=39 // pred_fallthru
          _
        // Predicated region
        $region53: #{decoder_layer_forward.3} parent=39 // pred_check
          %p502 = pneg %p171
        $region54: #{decoder_layer_forward.3} parent=39 // pred_check_branch
          %504 = sbr.rel (%p502) target = $region56
        $region55: #{decoder_layer_forward.3} parent=39 // pred_region
          %506 = dma.done [#allocation6], 256
        $region56: #{decoder_layer_forward.3} parent=39 // pred_fallthru
          _
      $region40: #{decoder_layer_forward.3} parent=5 // pred_fallthru
        _
      %p507 = scmp.le.s32.totalorder 2, %s27
      // Predicated region
      $region57: #{decoder_layer_forward.3} parent=5 // pred_check
        %p508 = pneg %p507
      $region58: #{decoder_layer_forward.3} parent=5 // pred_check_branch
        %510 = sbr.rel (%p508) target = $region60
      $region59: #{decoder_layer_forward.3} parent=5 // pred_region
        %s511 = ssub.s32 %s27, 2
      $region60: #{decoder_layer_forward.3} parent=5 // pred_fallthru
        _
    $region6: #{decoder_layer_forward.3} parent=1 // loop_footer
      %s31 = sadd.s32 1, %s27
    $region7: #{decoder_layer_forward.3} parent=1 // loop_footer_branch
      %26 = sbr.rel target = $region3
    $region8: #{decoder_layer_forward.3} parent=1 // loop_exit
      _
    %512 = vsyncpa [#allocation6], 1
    %s513 = scalar_lea.sflag [#allocation6], 1
    %514 = vsyncpa %s513, 1

// kernel: decoder_layer_forward.2
$region0: #{decoder_layer_forward.2}
  #allocation0 [shape = 'u32[]', space=smem, size = 0x4, offset = 0x4, fixed_abs, tag = 'smem constant byte address 0x4 - core index']
  #allocation1 [shape = 'u32[72,128]{1,0:T(1,128)}', space=vmem, size = 0x9000, scoped, tag = 'internal scratch']
  %s0 = inlined_call_operand.vmem [shape: f32[16,32], index: 0, kind: input, shape index: {}]
  %s1 = inlined_call_operand.vmem [shape: f32[16,16], index: 1, kind: input, shape index: {}]
  %s2 = inlined_call_operand.vmem [shape: f32[1,32], index: 2, kind: input, shape index: {}]
  %s3 = inlined_call_operand.vmem [shape: bf16[32,128], index: 3, kind: input, shape index: {}]
  %s4 = inlined_call_operand.vmem [shape: f32[1,64], index: 4, kind: input, shape index: {}]
  %s5 = inlined_call_operand.vmem [shape: f32[1,32], index: 5, kind: input, shape index: {}]
  %s6 = inlined_call_operand.vmem [shape: f32[16,64], index: 6, kind: input, shape index: {}]
  %s7 = inlined_call_operand.vmem [shape: f32[16,64], index: 7, kind: input, shape index: {}]
  %s8 = inlined_call_operand.vmem [shape: f32[64,64], index: 8, kind: input, shape index: {}]
  %s9 = inlined_call_operand.vmem [shape: f32[64,64], index: 9, kind: input, shape index: {}]
  %s10 = inlined_call_operand.vmem [shape: bf16[64,32], index: 10, kind: input, shape index: {}]
  %s11 = inlined_call_operand.vmem [shape: f32[1,32], index: 11, kind: input, shape index: {}]
  %s12 = inlined_call_operand.vmem [shape: f32[32,4], index: 12, kind: input, shape index: {}]
  %s13 = inlined_call_operand.vmem [shape: f32[16,68], index: 13, kind: output, shape index: {0}]
  %s14 = inlined_call_operand.vmem [shape: f32[16,64], index: 14, kind: output, shape index: {1}]
  %15 = xla_tuple %s13, %s14
  %s16 = sld [smem:[#allocation0]]
  $region70: #{decoder_layer_forward.2} parent=0
    _
  %s18 = ssub.s32 1, %s16
  %s19 = scalar_select 0, %s18, %s16
  // Predicated region
  $region2: #{decoder_layer_forward.2} parent=0 // pred_check
    _
  $region3: #{decoder_layer_forward.2} parent=0 // pred_check_branch
    %21 = sbr.rel (0) target = $region5
  $region4: #{decoder_layer_forward.2} parent=0 // pred_region
    _
  $region5: #{decoder_layer_forward.2} parent=0 // pred_fallthru
    _
  // Predicated region
  $region6: #{decoder_layer_forward.2} parent=0 // pred_check
    _
  $region7: #{decoder_layer_forward.2} parent=0 // pred_check_branch
    %23 = sbr.rel (0) target = $region9
  $region8: #{decoder_layer_forward.2} parent=0 // pred_region
    _
  $region9: #{decoder_layer_forward.2} parent=0 // pred_fallthru
    _
  // Predicated region
  $region10: #{decoder_layer_forward.2} parent=0 // pred_check
    _
  $region11: #{decoder_layer_forward.2} parent=0 // pred_check_branch
    %25 = sbr.rel (0) target = $region13
  $region12: #{decoder_layer_forward.2} parent=0 // pred_region
    _
  $region13: #{decoder_layer_forward.2} parent=0 // pred_fallthru
    _
  // Predicated region
  $region14: #{decoder_layer_forward.2} parent=0 // pred_check
    _
  $region15: #{decoder_layer_forward.2} parent=0 // pred_check_branch
    %27 = sbr.rel (0) target = $region17
  $region16: #{decoder_layer_forward.2} parent=0 // pred_region
    _
  $region17: #{decoder_layer_forward.2} parent=0 // pred_fallthru
    _
  // Predicated region
  $region18: #{decoder_layer_forward.2} parent=0 // pred_check
    _
  $region19: #{decoder_layer_forward.2} parent=0 // pred_check_branch
    %29 = sbr.rel (0) target = $region21
  $region20: #{decoder_layer_forward.2} parent=0 // pred_region
    _
  $region21: #{decoder_layer_forward.2} parent=0 // pred_fallthru
    _
  // Predicated region
  $region22: #{decoder_layer_forward.2} parent=0 // pred_check
    _
  $region23: #{decoder_layer_forward.2} parent=0 // pred_check_branch
    %31 = sbr.rel (0) target = $region25
  $region24: #{decoder_layer_forward.2} parent=0 // pred_region
    _
  $region25: #{decoder_layer_forward.2} parent=0 // pred_fallthru
    _
  // Predicated region
  $region26: #{decoder_layer_forward.2} parent=0 // pred_check
    _
  $region27: #{decoder_layer_forward.2} parent=0 // pred_check_branch
    %33 = sbr.rel (0) target = $region29
  $region28: #{decoder_layer_forward.2} parent=0 // pred_region
    _
  $region29: #{decoder_layer_forward.2} parent=0 // pred_fallthru
    _
  // Predicated region
  $region30: #{decoder_layer_forward.2} parent=0 // pred_check
    _
  $region31: #{decoder_layer_forward.2} parent=0 // pred_check_branch
    %35 = sbr.rel (0) target = $region33
  $region32: #{decoder_layer_forward.2} parent=0 // pred_region
    _
  $region33: #{decoder_layer_forward.2} parent=0 // pred_fallthru
    _
  // Predicated region
  $region34: #{decoder_layer_forward.2} parent=0 // pred_check
    _
  $region35: #{decoder_layer_forward.2} parent=0 // pred_check_branch
    %37 = sbr.rel (0) target = $region37
  $region36: #{decoder_layer_forward.2} parent=0 // pred_region
    _
  $region37: #{decoder_layer_forward.2} parent=0 // pred_fallthru
    _
  // Predicated region
  $region38: #{decoder_layer_forward.2} parent=0 // pred_check
    _
  $region39: #{decoder_layer_forward.2} parent=0 // pred_check_branch
    %39 = sbr.rel (0) target = $region41
  $region40: #{decoder_layer_forward.2} parent=0 // pred_region
    _
  $region41: #{decoder_layer_forward.2} parent=0 // pred_fallthru
    _
  // Predicated region
  $region42: #{decoder_layer_forward.2} parent=0 // pred_check
    _
  $region43: #{decoder_layer_forward.2} parent=0 // pred_check_branch
    %41 = sbr.rel (0) target = $region45
  $region44: #{decoder_layer_forward.2} parent=0 // pred_region
    _
  $region45: #{decoder_layer_forward.2} parent=0 // pred_fallthru
    _
  // Predicated region
  $region46: #{decoder_layer_forward.2} parent=0 // pred_check
    _
  $region47: #{decoder_layer_forward.2} parent=0 // pred_check_branch
    %43 = sbr.rel (0) target = $region49
  $region48: #{decoder_layer_forward.2} parent=0 // pred_region
    _
  $region49: #{decoder_layer_forward.2} parent=0 // pred_fallthru
    _
  // Predicated region
  $region50: #{decoder_layer_forward.2} parent=0 // pred_check
    _
  $region51: #{decoder_layer_forward.2} parent=0 // pred_check_branch
    %45 = sbr.rel (0) target = $region53
  $region52: #{decoder_layer_forward.2} parent=0 // pred_region
    _
  $region53: #{decoder_layer_forward.2} parent=0 // pred_fallthru
    _
  %v47 = vld [vmem:[%s0] sm:$0xff]
  %v48 = vld [vmem:[%s0 + $0x8] sm:$0xff]
  %v49 = vmul.f32 %v47, %v47
  %v50 = vmul.f32 %v48, %v48
  %vm51 = vcmask 261120
  %v52 = vsel %vm51, %v49, 0.0
  %53 = vadd.xlane.f32.xlu0 %v52
  %v54 = vpop.xlane.xlu0 %53
  %v55 = vsel %vm51, %v50, 0.0
  %56 = vadd.xlane.f32.xlu0 %v55
  %v57 = vpop.xlane.xlu0 %56
  %v58 = vrcp.pop 32.0
  %v59 = vmul.f32 32.0, %v58
  %v60 = vsub.f32 1.0, %v59
  %v61 = vmul.f32 %v58, %v60
  %v62 = vadd.f32 %v58, %v61
  %vm63 = vweird.f32 %v58
  %v64 = vsel %vm63, %v58, %v62
  %v65 = vmul.f32 %v54, %v64
  %v66 = vmul.f32 %v57, %v64
  %v67 = vadd.f32 %v65, 1e-06
  %v68 = vadd.f32 %v66, 1e-06
  %v69 = vrsqrt.pop %v67
  %v70 = vmul.f32 %v69, %v67
  %v71 = vmul.f32 %v70, %v69
  %v72 = vmul.f32 0.5, %v71
  %v73 = vsub.f32 1.5, %v72
  %v74 = vmul.f32 %v69, %v73
  %vm75 = vweird.f32 %v67
  %vm76 = vweird.f32 %v69
  %vm77 = vmor %vm75, %vm76
  %v78 = vsel %vm77, %v69, %v74
  %v79 = vrsqrt.pop %v68
  %v80 = vmul.f32 %v79, %v68
  %v81 = vmul.f32 %v80, %v79
  %v82 = vmul.f32 0.5, %v81
  %v83 = vsub.f32 1.5, %v82
  %v84 = vmul.f32 %v79, %v83
  %vm85 = vweird.f32 %v68
  %vm86 = vweird.f32 %v79
  %vm87 = vmor %vm85, %vm86
  %v88 = vsel %vm87, %v79, %v84
  %v89 = vmul.f32 %v47, %v78
  %v90 = vmul.f32 %v48, %v88
  %v91 = vld [vmem:[%s2] sm:$0x1]
  %v93 = vperm.slane %v91, 0
  %v95 = vmul.f32 %v89, %v93
  %v96 = vmul.f32 %v90, %v93
  %v97 = vpack.c.bf16 %v96, %v95
  %v98 = vld [vmem:[%s3] sm:$0xf]
  %v99 = vld [vmem:[%s3 + $0x4] sm:$0xf]
  %v100 = vld [vmem:[%s3 + $0x8] sm:$0xf]
  %v101 = vld [vmem:[%s3 + $0xc] sm:$0xf]
  %v106 = vunpack.c.l.b16 %v98
  %v107 = vunpack.c.l.b16 %v99
  %v108 = vunpack.c.l.b16 %v100
  %v109 = vunpack.c.l.b16 %v101
  %v110 = vpack.c.b16 %v107, %v106
  %v111 = vpack.c.b16 %v109, %v108
  %v115 = vsel %vm51, %v97, 0
  %117 = vmatpush.bf16.msra.mxu0 0
  %118 = vmatpush.bf16.msra.mxu0 0
  %119 = vmatpush.bf16.msra.mxu0 0
  %120 = vmatpush.bf16.msra.mxu0 0
  %121 = vmatpush.bf16.msra.mxu0 0
  %122 = vmatpush.bf16.msra.mxu0 0
  %123 = vmatpush.bf16.msra.mxu0 %v111
  %124 = vmatpush.bf16.msra.mxu0 %v110
  %125 = vmatmul.bf16.gmra.mxu0 %v115
  %v126 = vpop.f32.mrf.mxu0
  %v127 = vadd.f32 0.0, %v126
  %v128 = vpop.f32.mrf.mxu0
  %v129 = vadd.f32 0.0, %v128
  %130 = vdwg.mxu0
  %v131 = vld [vmem:[%s6] sm:$0xff]
  %v132 = vld [vmem:[%s6 + $0x8] sm:$0xff]
  %v133 = vld [vmem:[%s7] sm:$0xff]
  %v134 = vld [vmem:[%s7 + $0x8] sm:$0xff]
  %v135 = vld [vmem:[%s4] sm:$0x1]
  %v136 = vmul.f32 %v127, %v127
  %v137 = vmul.f32 %v129, %v129
  %v138 = vld [vmem:[%s8] sm:$0xff]
  %v139 = vld [vmem:[%s8 + $0x8] sm:$0xff]
  %v140 = vld [vmem:[%s8 + $0x10] sm:$0xff]
  %v141 = vld [vmem:[%s8 + $0x18] sm:$0xff]
  %v142 = vld [vmem:[%s8 + $0x20] sm:$0xff]
  %v143 = vld [vmem:[%s8 + $0x28] sm:$0xff]
  %v144 = vld [vmem:[%s8 + $0x30] sm:$0xff]
  %v145 = vld [vmem:[%s8 + $0x38] sm:$0xff]
  %vm146 = vcmask 523264
  %v148 = vsel %vm146, %v136, 0
  %v151 = vsel %vm146, %v137, 0
  %153 = vmatpush.msra.mxu0 0.0
  %154 = vmatpush.msra.mxu0 0.0
  %155 = vmatpush.msra.mxu0 0.0
  %156 = vmatpush.msra.mxu0 0.0
  %157 = vmatpush.msra.mxu0 0.0
  %158 = vmatpush.msra.mxu0 0.0
  %159 = vmatpush.msra.mxu0 0.0
  %160 = vmatpush.msra.mxu0 0.0
  %161 = vmatpush.msra.mxu0 %v145
  %162 = vmatpush.msra.mxu0 %v144
  %163 = vmatpush.msra.mxu0 %v143
  %164 = vmatpush.msra.mxu0 %v142
  %165 = vmatpush.msra.mxu0 %v141
  %166 = vmatpush.msra.mxu0 %v140
  %167 = vmatpush.msra.mxu0 %v139
  %168 = vmatpush.msra.mxu0 %v138
  %169 = vmatmul.f32.gmra.mxu0 %v148
  %v170 = vpop.f32.mrf.mxu0
  %v171 = vadd.f32 1e-06, %v170
  %172 = vmatmul.f32.gmra.mxu0 %v151
  %v173 = vpop.f32.mrf.mxu0
  %v174 = vadd.f32 1e-06, %v173
  %175 = vdwg.mxu0
  %v176 = vrsqrt.pop %v171
  %v177 = vmul.f32 %v176, %v171
  %v178 = vmul.f32 %v177, %v176
  %v179 = vmul.f32 0.5, %v178
  %v180 = vsub.f32 1.5, %v179
  %v181 = vmul.f32 %v176, %v180
  %vm182 = vweird.f32 %v171
  %vm183 = vweird.f32 %v176
  %vm184 = vmor %vm182, %vm183
  %v185 = vsel %vm184, %v176, %v181
  %v186 = vrsqrt.pop %v174
  %v187 = vmul.f32 %v186, %v174
  %v188 = vmul.f32 %v187, %v186
  %v189 = vmul.f32 0.5, %v188
  %v190 = vsub.f32 1.5, %v189
  %v191 = vmul.f32 %v186, %v190
  %vm192 = vweird.f32 %v174
  %vm193 = vweird.f32 %v186
  %vm194 = vmor %vm192, %vm193
  %v195 = vsel %vm194, %v186, %v191
  %v196 = vmul.f32 %v127, %v185
  %v197 = vmul.f32 %v129, %v195
  %v199 = vperm.slane %v135, 0
  %v201 = vmul.f32 %v196, %v199
  %v202 = vmul.f32 %v197, %v199
  %v203 = vld [vmem:[%s9] sm:$0xff]
  %v204 = vld [vmem:[%s9 + $0x8] sm:$0xff]
  %v205 = vld [vmem:[%s9 + $0x10] sm:$0xff]
  %v206 = vld [vmem:[%s9 + $0x18] sm:$0xff]
  %v207 = vld [vmem:[%s9 + $0x20] sm:$0xff]
  %v208 = vld [vmem:[%s9 + $0x28] sm:$0xff]
  %v209 = vld [vmem:[%s9 + $0x30] sm:$0xff]
  %v210 = vld [vmem:[%s9 + $0x38] sm:$0xff]
  %v212 = vsel %vm146, %v201, 0
  %v215 = vsel %vm146, %v202, 0
  %217 = vmatpush.msra.mxu0 0.0
  %218 = vmatpush.msra.mxu0 0.0
  %219 = vmatpush.msra.mxu0 0.0
  %220 = vmatpush.msra.mxu0 0.0
  %221 = vmatpush.msra.mxu0 0.0
  %222 = vmatpush.msra.mxu0 0.0
  %223 = vmatpush.msra.mxu0 0.0
  %224 = vmatpush.msra.mxu0 0.0
  %225 = vmatpush.msra.mxu0 %v210
  %226 = vmatpush.msra.mxu0 %v209
  %227 = vmatpush.msra.mxu0 %v208
  %228 = vmatpush.msra.mxu0 %v207
  %229 = vmatpush.msra.mxu0 %v206
  %230 = vmatpush.msra.mxu0 %v205
  %231 = vmatpush.msra.mxu0 %v204
  %232 = vmatpush.msra.mxu0 %v203
  %233 = vmatmul.f32.gmra.mxu0 %v212
  %v234 = vpop.f32.mrf.mxu0
  %v235 = vadd.f32 0.0, %v234
  %236 = vmatmul.f32.gmra.mxu0 %v215
  %v237 = vpop.f32.mrf.mxu0
  %v238 = vadd.f32 0.0, %v237
  %239 = vdwg.mxu0
  %v240 = vmul.f32 %v201, %v131
  %v241 = vmul.f32 %v202, %v132
  %v242 = vmul.f32 %v235, %v133
  %v243 = vmul.f32 %v238, %v134
  %v244 = vadd.f32 %v240, %v242
  %v245 = vadd.f32 %v241, %v243
  %v246 = vld [vmem:[%s5] sm:$0x1]
  %v247 = vld [vmem:[%s8] sm:$0xff]
  %v248 = vld [vmem:[%s8 + $0x8] sm:$0xff]
  %v249 = vld [vmem:[%s8 + $0x10] sm:$0xff]
  %v250 = vld [vmem:[%s8 + $0x18] sm:$0xff]
  %251 = vrot.lane.b32.xlu0 %v136, 64
  %v252 = vpop.permute.xlu0 %251
  %253 = vrot.lane.b32.xlu0 %v137, 64
  %v254 = vpop.permute.xlu0 %253
  %v255 = vsel %vm51, %v252, 0
  %v257 = vsel %vm51, %v254, 0
  %259 = vmatpush.msra.mxu0 0.0
  %260 = vmatpush.msra.mxu0 0.0
  %261 = vmatpush.msra.mxu0 0.0
  %262 = vmatpush.msra.mxu0 0.0
  %263 = vmatpush.msra.mxu0 0.0
  %264 = vmatpush.msra.mxu0 0.0
  %265 = vmatpush.msra.mxu0 0.0
  %266 = vmatpush.msra.mxu0 0.0
  %267 = vmatpush.msra.mxu0 0.0
  %268 = vmatpush.msra.mxu0 0.0
  %269 = vmatpush.msra.mxu0 0.0
  %270 = vmatpush.msra.mxu0 0.0
  %271 = vmatpush.msra.mxu0 %v250
  %272 = vmatpush.msra.mxu0 %v249
  %273 = vmatpush.msra.mxu0 %v248
  %274 = vmatpush.msra.mxu0 %v247
  %275 = vmatmul.f32.gmra.mxu0 %v255
  %v276 = vpop.f32.mrf.mxu0
  %v277 = vadd.f32 1e-06, %v276
  %278 = vmatmul.f32.gmra.mxu0 %v257
  %v279 = vpop.f32.mrf.mxu0
  %v280 = vadd.f32 1e-06, %v279
  %281 = vdwg.mxu0
  %v282 = vrsqrt.pop %v277
  %v283 = vmul.f32 %v282, %v277
  %v284 = vmul.f32 %v283, %v282
  %v285 = vmul.f32 0.5, %v284
  %v286 = vsub.f32 1.5, %v285
  %v287 = vmul.f32 %v282, %v286
  %vm288 = vweird.f32 %v277
  %vm289 = vweird.f32 %v282
  %vm290 = vmor %vm288, %vm289
  %v291 = vsel %vm290, %v282, %v287
  %v292 = vrsqrt.pop %v280
  %v293 = vmul.f32 %v292, %v280
  %v294 = vmul.f32 %v293, %v292
  %v295 = vmul.f32 0.5, %v294
  %v296 = vsub.f32 1.5, %v295
  %v297 = vmul.f32 %v292, %v296
  %vm298 = vweird.f32 %v280
  %vm299 = vweird.f32 %v292
  %vm300 = vmor %vm298, %vm299
  %v301 = vsel %vm300, %v292, %v297
  %304 = vrot.lane.b32.xlu0 %v291, 64
  %v305 = vpop.permute.xlu0 %304
  %306 = vrot.lane.b32.xlu0 %v301, 64
  %v307 = vpop.permute.xlu0 %306
  %v310 = vmul.f32 %v127, %v305
  %v311 = vmul.f32 %v129, %v307
  %v313 = vperm.slane %v246, 0
  %314 = vrot.lane.b32.xlu0 %v313, 64
  %v315 = vpop.permute.xlu0 %314
  %v317 = vmul.f32 %v310, %v315
  %v318 = vmul.f32 %v311, %v315
  %v319 = vld [vmem:[%s9] sm:$0xff]
  %v320 = vld [vmem:[%s9 + $0x8] sm:$0xff]
  %v321 = vld [vmem:[%s9 + $0x10] sm:$0xff]
  %v322 = vld [vmem:[%s9 + $0x18] sm:$0xff]
  %325 = vrot.lane.b32.xlu0 %v317, 64
  %v326 = vpop.permute.xlu0 %325
  %327 = vrot.lane.b32.xlu0 %v318, 64
  %v328 = vpop.permute.xlu0 %327
  %v329 = vsel %vm51, %v326, 0
  %v331 = vsel %vm51, %v328, 0
  %333 = vmatpush.msra.mxu0 0.0
  %334 = vmatpush.msra.mxu0 0.0
  %335 = vmatpush.msra.mxu0 0.0
  %336 = vmatpush.msra.mxu0 0.0
  %337 = vmatpush.msra.mxu0 0.0
  %338 = vmatpush.msra.mxu0 0.0
  %339 = vmatpush.msra.mxu0 0.0
  %340 = vmatpush.msra.mxu0 0.0
  %341 = vmatpush.msra.mxu0 0.0
  %342 = vmatpush.msra.mxu0 0.0
  %343 = vmatpush.msra.mxu0 0.0
  %344 = vmatpush.msra.mxu0 0.0
  %345 = vmatpush.msra.mxu0 %v322
  %346 = vmatpush.msra.mxu0 %v321
  %347 = vmatpush.msra.mxu0 %v320
  %348 = vmatpush.msra.mxu0 %v319
  %349 = vmatmul.f32.gmra.mxu0 %v329
  %v350 = vpop.f32.mrf.mxu0
  %v351 = vadd.f32 0.0, %v350
  %352 = vmatmul.f32.gmra.mxu0 %v331
  %v353 = vpop.f32.mrf.mxu0
  %v354 = vadd.f32 0.0, %v353
  %355 = vdwg.mxu0
  %358 = vrot.lane.b32.xlu0 %v131, 64
  %v359 = vpop.permute.xlu0 %358
  %360 = vrot.lane.b32.xlu0 %v132, 64
  %v361 = vpop.permute.xlu0 %360
  %v364 = vmul.f32 %v317, %v359
  %v365 = vmul.f32 %v318, %v361
  %v366 = vmul.f32 %v351, %v133
  %v367 = vmul.f32 %v354, %v134
  %370 = vrot.lane.b32.xlu0 %v366, 64
  %v371 = vpop.permute.xlu0 %370
  %372 = vrot.lane.b32.xlu0 %v367, 64
  %v373 = vpop.permute.xlu0 %372
  %v376 = vadd.f32 %v364, %v371
  %v377 = vadd.f32 %v365, %v373
  %380 = vrot.lane.b32.xlu0 %v376, 64
  %v381 = vpop.permute.xlu0 %380
  %382 = vrot.lane.b32.xlu0 %v377, 64
  %v383 = vpop.permute.xlu0 %382
  %388 = vrot.lane.b32.xlu0 %v127, 64
  %v389 = vpop.permute.xlu0 %388
  %390 = vrot.lane.b32.xlu0 %v129, 64
  %v391 = vpop.permute.xlu0 %390
  %v394 = vsel %vm51, %v381, %v389
  %v395 = vsel %vm51, %v383, %v391
  %396 = vst.msk [vmem:[%s14] sm:$0xff] %vm146, %v394
  %397 = vst.msk [vmem:[%s14 + $0x8] sm:$0xff] %vm146, %v395
  %v398 = vld [vmem:[%s1] sm:$0xff]
  %v399 = vld [vmem:[%s1 + $0x8] sm:$0xff]
  %vm400 = vcmask 130048
  %v402 = vsel %vm400, %v244, 0
  %v405 = vsel %vm400, %v245, 0
  %v407 = vsel %vm400, %v381, 0
  %v409 = vsel %vm400, %v383, 0
  %411 = vmatpush.xpose.msra.mxu0 0.0
  %412 = vmatpush.xpose.msra.mxu0 0.0
  %413 = vmatpush.xpose.msra.mxu0 0.0
  %414 = vmatpush.xpose.msra.mxu0 0.0
  %415 = vmatpush.xpose.msra.mxu0 0.0
  %416 = vmatpush.xpose.msra.mxu0 0.0
  %417 = vmatpush.xpose.msra.mxu0 0.0
  %418 = vmatpush.xpose.msra.mxu0 0.0
  %419 = vmatpush.xpose.msra.mxu0 0.0
  %420 = vmatpush.xpose.msra.mxu0 0.0
  %421 = vmatpush.xpose.msra.mxu0 0.0
  %422 = vmatpush.xpose.msra.mxu0 0.0
  %423 = vmatpush.xpose.msra.mxu0 0.0
  %424 = vmatpush.xpose.msra.mxu0 0.0
  %425 = vmatpush.xpose.msra.mxu0 %v409
  %426 = vmatpush.xpose.msra.mxu0 %v407
  %427 = vmatmul.f32.gmra.mxu0 %v402
  %v428 = vpop.f32.mrf.mxu0
  %v429 = vadd.f32 0.0, %v428
  %430 = vmatmul.f32.gmra.mxu0 %v405
  %v431 = vpop.f32.mrf.mxu0
  %v432 = vadd.f32 0.0, %v431
  %433 = vdwg.mxu0
  %v434 = vmul.f32 %v429, 0.25
  %v435 = vmul.f32 %v432, 0.25
  %v436 = vadd.f32 %v434, %v398
  %v437 = vadd.f32 %v435, %v399
  %v438 = vsel %vm400, %v436, -inf
  %439 = vmax.xlane.f32.xlu0 %v438
  %v440 = vpop.xlane.xlu0 %439
  %v441 = vsel %vm400, %v437, -inf
  %442 = vmax.xlane.f32.xlu0 %v441
  %v443 = vpop.xlane.xlu0 %442
  %v444 = vsub.f32 %v436, %v440
  %v445 = vsub.f32 %v437, %v443
  %v446 = vmul.f32 %v444, 1.442695
  %v447 = vpow.pop %v446
  %v448 = vmul.f32 %v445, 1.442695
  %v449 = vpow.pop %v448
  %v450 = vsel %vm400, %v447, 0.0
  %451 = vadd.xlane.f32.xlu0 %v450
  %v452 = vpop.xlane.xlu0 %451
  %v453 = vsel %vm400, %v449, 0.0
  %454 = vadd.xlane.f32.xlu0 %v453
  %v455 = vpop.xlane.xlu0 %454
  %v456 = vrcp.pop %v452
  %v457 = vrcp.pop %v455
  %v458 = vmul.f32 %v447, %v456
  %v459 = vmul.f32 %v449, %v457
  %460 = vrot.lane.b32.xlu0 %v127, 32
  %v461 = vpop.permute.xlu0 %460
  %462 = vrot.lane.b32.xlu0 %v129, 32
  %v463 = vpop.permute.xlu0 %462
  %v467 = vsel %vm400, %v458, 0
  %v470 = vsel %vm400, %v459, 0
  %472 = vmatpush.msra.mxu0 0.0
  %473 = vmatpush.msra.mxu0 0.0
  %474 = vmatpush.msra.mxu0 0.0
  %475 = vmatpush.msra.mxu0 0.0
  %476 = vmatpush.msra.mxu0 0.0
  %477 = vmatpush.msra.mxu0 0.0
  %478 = vmatpush.msra.mxu0 0.0
  %479 = vmatpush.msra.mxu0 0.0
  %480 = vmatpush.msra.mxu0 0.0
  %481 = vmatpush.msra.mxu0 0.0
  %482 = vmatpush.msra.mxu0 0.0
  %483 = vmatpush.msra.mxu0 0.0
  %484 = vmatpush.msra.mxu0 0.0
  %485 = vmatpush.msra.mxu0 0.0
  %486 = vmatpush.msra.mxu0 %v463
  %487 = vmatpush.msra.mxu0 %v461
  %488 = vmatmul.f32.gmra.mxu0 %v467
  %v489 = vpop.f32.mrf.mxu0
  %v490 = vadd.f32 0.0, %v489
  %491 = vmatmul.f32.gmra.mxu0 %v470
  %v492 = vpop.f32.mrf.mxu0
  %v493 = vadd.f32 0.0, %v492
  %494 = vdwg.mxu0
  %495 = vrot.lane.b32.xlu0 %v244, 112
  %v496 = vpop.permute.xlu0 %495
  %497 = vrot.lane.b32.xlu0 %v245, 112
  %v498 = vpop.permute.xlu0 %497
  %v499 = vsel %vm400, %v496, 0
  %v501 = vsel %vm400, %v498, 0
  %503 = vmatpush.xpose.msra.mxu0 0.0
  %504 = vmatpush.xpose.msra.mxu0 0.0
  %505 = vmatpush.xpose.msra.mxu0 0.0
  %506 = vmatpush.xpose.msra.mxu0 0.0
  %507 = vmatpush.xpose.msra.mxu0 0.0
  %508 = vmatpush.xpose.msra.mxu0 0.0
  %509 = vmatpush.xpose.msra.mxu0 0.0
  %510 = vmatpush.xpose.msra.mxu0 0.0
  %511 = vmatpush.xpose.msra.mxu0 0.0
  %512 = vmatpush.xpose.msra.mxu0 0.0
  %513 = vmatpush.xpose.msra.mxu0 0.0
  %514 = vmatpush.xpose.msra.mxu0 0.0
  %515 = vmatpush.xpose.msra.mxu0 0.0
  %516 = vmatpush.xpose.msra.mxu0 0.0
  %517 = vmatpush.xpose.msra.mxu0 %v409
  %518 = vmatpush.xpose.msra.mxu0 %v407
  %519 = vmatmul.f32.gmra.mxu0 %v499
  %v520 = vpop.f32.mrf.mxu0
  %v521 = vadd.f32 0.0, %v520
  %522 = vmatmul.f32.gmra.mxu0 %v501
  %v523 = vpop.f32.mrf.mxu0
  %v524 = vadd.f32 0.0, %v523
  %525 = vdwg.mxu0
  %v526 = vmul.f32 %v521, 0.25
  %v527 = vmul.f32 %v524, 0.25
  %v528 = vadd.f32 %v526, %v398
  %v529 = vadd.f32 %v527, %v399
  %v530 = vsel %vm400, %v528, -inf
  %531 = vmax.xlane.f32.xlu0 %v530
  %v532 = vpop.xlane.xlu0 %531
  %v533 = vsel %vm400, %v529, -inf
  %534 = vmax.xlane.f32.xlu0 %v533
  %v535 = vpop.xlane.xlu0 %534
  %v536 = vsub.f32 %v528, %v532
  %v537 = vsub.f32 %v529, %v535
  %v538 = vmul.f32 %v536, 1.442695
  %v539 = vpow.pop %v538
  %v540 = vmul.f32 %v537, 1.442695
  %v541 = vpow.pop %v540
  %v542 = vsel %vm400, %v539, 0.0
  %543 = vadd.xlane.f32.xlu0 %v542
  %v544 = vpop.xlane.xlu0 %543
  %v545 = vsel %vm400, %v541, 0.0
  %546 = vadd.xlane.f32.xlu0 %v545
  %v547 = vpop.xlane.xlu0 %546
  %v548 = vrcp.pop %v544
  %v549 = vrcp.pop %v547
  %v550 = vmul.f32 %v539, %v548
  %v551 = vmul.f32 %v541, %v549
  %v553 = vsel %vm400, %v550, 0
  %v556 = vsel %vm400, %v551, 0
  %558 = vmatpush.msra.mxu0 0.0
  %559 = vmatpush.msra.mxu0 0.0
  %560 = vmatpush.msra.mxu0 0.0
  %561 = vmatpush.msra.mxu0 0.0
  %562 = vmatpush.msra.mxu0 0.0
  %563 = vmatpush.msra.mxu0 0.0
  %564 = vmatpush.msra.mxu0 0.0
  %565 = vmatpush.msra.mxu0 0.0
  %566 = vmatpush.msra.mxu0 0.0
  %567 = vmatpush.msra.mxu0 0.0
  %568 = vmatpush.msra.mxu0 0.0
  %569 = vmatpush.msra.mxu0 0.0
  %570 = vmatpush.msra.mxu0 0.0
  %571 = vmatpush.msra.mxu0 0.0
  %572 = vmatpush.msra.mxu0 %v463
  %573 = vmatpush.msra.mxu0 %v461
  %574 = vmatmul.f32.gmra.mxu0 %v553
  %v575 = vpop.f32.mrf.mxu0
  %v576 = vadd.f32 0.0, %v575
  %577 = vmatmul.f32.gmra.mxu0 %v556
  %v578 = vpop.f32.mrf.mxu0
  %v579 = vadd.f32 0.0, %v578
  %580 = vdwg.mxu0
  %581 = vrot.lane.b32.xlu0 %v244, 96
  %v582 = vpop.permute.xlu0 %581
  %583 = vrot.lane.b32.xlu0 %v245, 96
  %v584 = vpop.permute.xlu0 %583
  %585 = vrot.lane.b32.xlu0 %v376, 48
  %v586 = vpop.permute.xlu0 %585
  %587 = vrot.lane.b32.xlu0 %v377, 48
  %v588 = vpop.permute.xlu0 %587
  %v589 = vsel %vm400, %v582, 0
  %v591 = vsel %vm400, %v584, 0
  %v593 = vsel %vm400, %v586, 0
  %v595 = vsel %vm400, %v588, 0
  %597 = vmatpush.xpose.msra.mxu0 0.0
  %598 = vmatpush.xpose.msra.mxu0 0.0
  %599 = vmatpush.xpose.msra.mxu0 0.0
  %600 = vmatpush.xpose.msra.mxu0 0.0
  %601 = vmatpush.xpose.msra.mxu0 0.0
  %602 = vmatpush.xpose.msra.mxu0 0.0
  %603 = vmatpush.xpose.msra.mxu0 0.0
  %604 = vmatpush.xpose.msra.mxu0 0.0
  %605 = vmatpush.xpose.msra.mxu0 0.0
  %606 = vmatpush.xpose.msra.mxu0 0.0
  %607 = vmatpush.xpose.msra.mxu0 0.0
  %608 = vmatpush.xpose.msra.mxu0 0.0
  %609 = vmatpush.xpose.msra.mxu0 0.0
  %610 = vmatpush.xpose.msra.mxu0 0.0
  %611 = vmatpush.xpose.msra.mxu0 %v595
  %612 = vmatpush.xpose.msra.mxu0 %v593
  %613 = vmatmul.f32.gmra.mxu0 %v589
  %v614 = vpop.f32.mrf.mxu0
  %v615 = vadd.f32 0.0, %v614
  %616 = vmatmul.f32.gmra.mxu0 %v591
  %v617 = vpop.f32.mrf.mxu0
  %v618 = vadd.f32 0.0, %v617
  %619 = vdwg.mxu0
  %v620 = vmul.f32 %v615, 0.25
  %v621 = vmul.f32 %v618, 0.25
  %v622 = vadd.f32 %v620, %v398
  %v623 = vadd.f32 %v621, %v399
  %v624 = vsel %vm400, %v622, -inf
  %625 = vmax.xlane.f32.xlu0 %v624
  %v626 = vpop.xlane.xlu0 %625
  %v627 = vsel %vm400, %v623, -inf
  %628 = vmax.xlane.f32.xlu0 %v627
  %v629 = vpop.xlane.xlu0 %628
  %v630 = vsub.f32 %v622, %v626
  %v631 = vsub.f32 %v623, %v629
  %v632 = vmul.f32 %v630, 1.442695
  %v633 = vpow.pop %v632
  %v634 = vmul.f32 %v631, 1.442695
  %v635 = vpow.pop %v634
  %v636 = vsel %vm400, %v633, 0.0
  %637 = vadd.xlane.f32.xlu0 %v636
  %v638 = vpop.xlane.xlu0 %637
  %v639 = vsel %vm400, %v635, 0.0
  %640 = vadd.xlane.f32.xlu0 %v639
  %v641 = vpop.xlane.xlu0 %640
  %v642 = vrcp.pop %v638
  %v643 = vrcp.pop %v641
  %v644 = vmul.f32 %v633, %v642
  %v645 = vmul.f32 %v635, %v643
  %646 = vrot.lane.b32.xlu0 %v127, 16
  %v647 = vpop.permute.xlu0 %646
  %648 = vrot.lane.b32.xlu0 %v129, 16
  %v649 = vpop.permute.xlu0 %648
  %v653 = vsel %vm400, %v644, 0
  %v656 = vsel %vm400, %v645, 0
  %658 = vmatpush.msra.mxu0 0.0
  %659 = vmatpush.msra.mxu0 0.0
  %660 = vmatpush.msra.mxu0 0.0
  %661 = vmatpush.msra.mxu0 0.0
  %662 = vmatpush.msra.mxu0 0.0
  %663 = vmatpush.msra.mxu0 0.0
  %664 = vmatpush.msra.mxu0 0.0
  %665 = vmatpush.msra.mxu0 0.0
  %666 = vmatpush.msra.mxu0 0.0
  %667 = vmatpush.msra.mxu0 0.0
  %668 = vmatpush.msra.mxu0 0.0
  %669 = vmatpush.msra.mxu0 0.0
  %670 = vmatpush.msra.mxu0 0.0
  %671 = vmatpush.msra.mxu0 0.0
  %672 = vmatpush.msra.mxu0 %v649
  %673 = vmatpush.msra.mxu0 %v647
  %674 = vmatmul.f32.gmra.mxu0 %v653
  %v675 = vpop.f32.mrf.mxu0
  %v676 = vadd.f32 0.0, %v675
  %677 = vmatmul.f32.gmra.mxu0 %v656
  %v678 = vpop.f32.mrf.mxu0
  %v679 = vadd.f32 0.0, %v678
  %680 = vdwg.mxu0
  %681 = vrot.lane.b32.xlu0 %v244, 80
  %v682 = vpop.permute.xlu0 %681
  %683 = vrot.lane.b32.xlu0 %v245, 80
  %v684 = vpop.permute.xlu0 %683
  %v685 = vsel %vm400, %v682, 0
  %v687 = vsel %vm400, %v684, 0
  %689 = vmatpush.xpose.msra.mxu0 0.0
  %690 = vmatpush.xpose.msra.mxu0 0.0
  %691 = vmatpush.xpose.msra.mxu0 0.0
  %692 = vmatpush.xpose.msra.mxu0 0.0
  %693 = vmatpush.xpose.msra.mxu0 0.0
  %694 = vmatpush.xpose.msra.mxu0 0.0
  %695 = vmatpush.xpose.msra.mxu0 0.0
  %696 = vmatpush.xpose.msra.mxu0 0.0
  %697 = vmatpush.xpose.msra.mxu0 0.0
  %698 = vmatpush.xpose.msra.mxu0 0.0
  %699 = vmatpush.xpose.msra.mxu0 0.0
  %700 = vmatpush.xpose.msra.mxu0 0.0
  %701 = vmatpush.xpose.msra.mxu0 0.0
  %702 = vmatpush.xpose.msra.mxu0 0.0
  %703 = vmatpush.xpose.msra.mxu0 %v595
  %704 = vmatpush.xpose.msra.mxu0 %v593
  %705 = vmatmul.f32.gmra.mxu0 %v685
  %v706 = vpop.f32.mrf.mxu0
  %v707 = vadd.f32 0.0, %v706
  %708 = vmatmul.f32.gmra.mxu0 %v687
  %v709 = vpop.f32.mrf.mxu0
  %v710 = vadd.f32 0.0, %v709
  %711 = vdwg.mxu0
  %v712 = vmul.f32 %v707, 0.25
  %v713 = vmul.f32 %v710, 0.25
  %v714 = vadd.f32 %v712, %v398
  %v715 = vadd.f32 %v713, %v399
  %v716 = vsel %vm400, %v714, -inf
  %717 = vmax.xlane.f32.xlu0 %v716
  %v718 = vpop.xlane.xlu0 %717
  %v719 = vsel %vm400, %v715, -inf
  %720 = vmax.xlane.f32.xlu0 %v719
  %v721 = vpop.xlane.xlu0 %720
  %v722 = vsub.f32 %v714, %v718
  %v723 = vsub.f32 %v715, %v721
  %v724 = vmul.f32 %v722, 1.442695
  %v725 = vpow.pop %v724
  %v726 = vmul.f32 %v723, 1.442695
  %v727 = vpow.pop %v726
  %v728 = vsel %vm400, %v725, 0.0
  %729 = vadd.xlane.f32.xlu0 %v728
  %v730 = vpop.xlane.xlu0 %729
  %v731 = vsel %vm400, %v727, 0.0
  %732 = vadd.xlane.f32.xlu0 %v731
  %v733 = vpop.xlane.xlu0 %732
  %v734 = vrcp.pop %v730
  %v735 = vrcp.pop %v733
  %v736 = vmul.f32 %v725, %v734
  %v737 = vmul.f32 %v727, %v735
  %v739 = vsel %vm400, %v736, 0
  %v742 = vsel %vm400, %v737, 0
  %744 = vmatpush.msra.mxu0 0.0
  %745 = vmatpush.msra.mxu0 0.0
  %746 = vmatpush.msra.mxu0 0.0
  %747 = vmatpush.msra.mxu0 0.0
  %748 = vmatpush.msra.mxu0 0.0
  %749 = vmatpush.msra.mxu0 0.0
  %750 = vmatpush.msra.mxu0 0.0
  %751 = vmatpush.msra.mxu0 0.0
  %752 = vmatpush.msra.mxu0 0.0
  %753 = vmatpush.msra.mxu0 0.0
  %754 = vmatpush.msra.mxu0 0.0
  %755 = vmatpush.msra.mxu0 0.0
  %756 = vmatpush.msra.mxu0 0.0
  %757 = vmatpush.msra.mxu0 0.0
  %758 = vmatpush.msra.mxu0 %v649
  %759 = vmatpush.msra.mxu0 %v647
  %760 = vmatmul.f32.gmra.mxu0 %v739
  %v761 = vpop.f32.mrf.mxu0
  %v762 = vadd.f32 0.0, %v761
  %763 = vmatmul.f32.gmra.mxu0 %v742
  %v764 = vpop.f32.mrf.mxu0
  %v765 = vadd.f32 0.0, %v764
  %766 = vdwg.mxu0
  %769 = vrot.lane.b32.xlu0 %v576, 16
  %v770 = vpop.permute.xlu0 %769
  %771 = vrot.lane.b32.xlu0 %v579, 16
  %v772 = vpop.permute.xlu0 %771
  %777 = vrot.lane.b32.xlu0 %v676, 32
  %v778 = vpop.permute.xlu0 %777
  %779 = vrot.lane.b32.xlu0 %v679, 32
  %v780 = vpop.permute.xlu0 %779
  %785 = vrot.lane.b32.xlu0 %v762, 48
  %v786 = vpop.permute.xlu0 %785
  %787 = vrot.lane.b32.xlu0 %v765, 48
  %v788 = vpop.permute.xlu0 %787
  %v791 = vsel %vm400, %v490, %v770
  %v792 = vsel %vm400, %v493, %v772
  %v793 = vsel %vm51, %v791, %v778
  %v794 = vsel %vm51, %v792, %v780
  %vm795 = vcmask 392192
  %v796 = vsel %vm795, %v793, %v786
  %v797 = vsel %vm795, %v794, %v788
  %v798 = vpack.c.bf16 %v797, %v796
  %v799 = vld [vmem:[%s10] sm:$0xf]
  %v800 = vld [vmem:[%s10 + $0x4] sm:$0xf]
  %v801 = vld [vmem:[%s10 + $0x8] sm:$0xf]
  %v802 = vld [vmem:[%s10 + $0xc] sm:$0xf]
  %v803 = vld [vmem:[%s10 + $0x10] sm:$0xf]
  %v804 = vld [vmem:[%s10 + $0x14] sm:$0xf]
  %v805 = vld [vmem:[%s10 + $0x18] sm:$0xf]
  %v806 = vld [vmem:[%s10 + $0x1c] sm:$0xf]
  %v815 = vunpack.c.l.b16 %v799
  %v816 = vunpack.c.l.b16 %v800
  %v817 = vunpack.c.l.b16 %v801
  %v818 = vunpack.c.l.b16 %v802
  %v819 = vunpack.c.l.b16 %v803
  %v820 = vunpack.c.l.b16 %v804
  %v821 = vunpack.c.l.b16 %v805
  %v822 = vunpack.c.l.b16 %v806
  %v823 = vpack.c.b16 %v816, %v815
  %v824 = vpack.c.b16 %v818, %v817
  %v825 = vpack.c.b16 %v820, %v819
  %v826 = vpack.c.b16 %v822, %v821
  %v832 = vsel %vm146, %v798, 0
  %834 = vmatpush.bf16.msra.mxu0 0
  %835 = vmatpush.bf16.msra.mxu0 0
  %836 = vmatpush.bf16.msra.mxu0 0
  %837 = vmatpush.bf16.msra.mxu0 0
  %838 = vmatpush.bf16.msra.mxu0 %v826
  %839 = vmatpush.bf16.msra.mxu0 %v825
  %840 = vmatpush.bf16.msra.mxu0 %v824
  %841 = vmatpush.bf16.msra.mxu0 %v823
  %842 = vmatmul.bf16.gmra.mxu0 %v832
  %v843 = vpop.f32.mrf.mxu0
  %v844 = vadd.f32 0.0, %v843
  %v845 = vpop.f32.mrf.mxu0
  %v846 = vadd.f32 0.0, %v845
  %847 = vdwg.mxu0
  %v848 = vadd.f32 %v47, %v844
  %v849 = vadd.f32 %v48, %v846
  %v850 = vmul.f32 %v848, %v848
  %v851 = vmul.f32 %v849, %v849
  %v852 = vsel %vm51, %v850, 0.0
  %853 = vadd.xlane.f32.xlu0 %v852
  %v854 = vpop.xlane.xlu0 %853
  %v855 = vsel %vm51, %v851, 0.0
  %856 = vadd.xlane.f32.xlu0 %v855
  %v857 = vpop.xlane.xlu0 %856
  %v858 = vmul.f32 %v854, %v64
  %v859 = vmul.f32 %v857, %v64
  %v860 = vadd.f32 %v858, 1e-06
  %v861 = vadd.f32 %v859, 1e-06
  %v862 = vrsqrt.pop %v860
  %v863 = vmul.f32 %v862, %v860
  %v864 = vmul.f32 %v863, %v862
  %v865 = vmul.f32 0.5, %v864
  %v866 = vsub.f32 1.5, %v865
  %v867 = vmul.f32 %v862, %v866
  %vm868 = vweird.f32 %v860
  %vm869 = vweird.f32 %v862
  %vm870 = vmor %vm868, %vm869
  %v871 = vsel %vm870, %v862, %v867
  %v872 = vrsqrt.pop %v861
  %v873 = vmul.f32 %v872, %v861
  %v874 = vmul.f32 %v873, %v872
  %v875 = vmul.f32 0.5, %v874
  %v876 = vsub.f32 1.5, %v875
  %v877 = vmul.f32 %v872, %v876
  %vm878 = vweird.f32 %v861
  %vm879 = vweird.f32 %v872
  %vm880 = vmor %vm878, %vm879
  %v881 = vsel %vm880, %v872, %v877
  %v882 = vmul.f32 %v848, %v871
  %v883 = vmul.f32 %v849, %v881
  %v884 = vld [vmem:[%s11] sm:$0x1]
  %v886 = vperm.slane %v884, 0
  %v888 = vmul.f32 %v882, %v886
  %v889 = vmul.f32 %v883, %v886
  %v890 = vld [vmem:[%s12] sm:$0xff]
  %v891 = vld [vmem:[%s12 + $0x8] sm:$0xff]
  %v892 = vld [vmem:[%s12 + $0x10] sm:$0xff]
  %v893 = vld [vmem:[%s12 + $0x18] sm:$0xff]
  %v895 = vsel %vm51, %v888, 0
  %v898 = vsel %vm51, %v889, 0
  %900 = vmatpush.msra.mxu0 0.0
  %901 = vmatpush.msra.mxu0 0.0
  %902 = vmatpush.msra.mxu0 0.0
  %903 = vmatpush.msra.mxu0 0.0
  %904 = vmatpush.msra.mxu0 0.0
  %905 = vmatpush.msra.mxu0 0.0
  %906 = vmatpush.msra.mxu0 0.0
  %907 = vmatpush.msra.mxu0 0.0
  %908 = vmatpush.msra.mxu0 0.0
  %909 = vmatpush.msra.mxu0 0.0
  %910 = vmatpush.msra.mxu0 0.0
  %911 = vmatpush.msra.mxu0 0.0
  %912 = vmatpush.msra.mxu0 %v893
  %913 = vmatpush.msra.mxu0 %v892
  %914 = vmatpush.msra.mxu0 %v891
  %915 = vmatpush.msra.mxu0 %v890
  %916 = vmatmul.f32.gmra.mxu0 %v895
  %v917 = vpop.f32.mrf.mxu0
  %v918 = vadd.f32 0.0, %v917
  %919 = vmatmul.f32.gmra.mxu0 %v898
  %v920 = vpop.f32.mrf.mxu0
  %v921 = vadd.f32 0.0, %v920
  %922 = vdwg.mxu0
  %923 = vrot.lane.b32.xlu0 %v888, 32
  %v924 = vpop.permute.xlu0 %923
  %925 = vrot.lane.b32.xlu0 %v889, 32
  %v926 = vpop.permute.xlu0 %925
  %931 = vrot.lane.b32.xlu0 %v918, 64
  %v932 = vpop.permute.xlu0 %931
  %933 = vrot.lane.b32.xlu0 %v921, 64
  %v934 = vpop.permute.xlu0 %933
  %v937 = vsel %vm51, %v848, %v924
  %v938 = vsel %vm51, %v849, %v926
  %v939 = vsel %vm146, %v937, %v932
  %v940 = vsel %vm146, %v938, %v934
  %vm941 = vcmask 556032
  %942 = vst.msk [vmem:[%s13] sm:$0xff] %vm941, %v939
  %943 = vst.msk [vmem:[%s13 + $0x8] sm:$0xff] %vm941, %v940
  // Predicated region
  $region54: #{decoder_layer_forward.2} parent=0 // pred_check
    _
  $region55: #{decoder_layer_forward.2} parent=0 // pred_check_branch
    %945 = sbr.rel (0) target = $region57
  $region56: #{decoder_layer_forward.2} parent=0 // pred_region
    _
  $region57: #{decoder_layer_forward.2} parent=0 // pred_fallthru
    _
  // Predicated region
  $region58: #{decoder_layer_forward.2} parent=0 // pred_check
    _
  $region59: #{decoder_layer_forward.2} parent=0 // pred_check_branch
    %947 = sbr.rel (0) target = $region61
  $region60: #{decoder_layer_forward.2} parent=0 // pred_region
    _
  $region61: #{decoder_layer_forward.2} parent=0 // pred_fallthru
    _
  // Predicated region
  $region62: #{decoder_layer_forward.2} parent=0 // pred_check
    _
  $region63: #{decoder_layer_forward.2} parent=0 // pred_check_branch
    %949 = sbr.rel (0) target = $region65
  $region64: #{decoder_layer_forward.2} parent=0 // pred_region
    _
  $region65: #{decoder_layer_forward.2} parent=0 // pred_fallthru
    _
  // Predicated region
  $region66: #{decoder_layer_forward.2} parent=0 // pred_check
    _
  $region67: #{decoder_layer_forward.2} parent=0 // pred_check_branch
    %951 = sbr.rel (0) target = $region69
  $region68: #{decoder_layer_forward.2} parent=0 // pred_region
    _
  $region69: #{decoder_layer_forward.2} parent=0 // pred_fallthru
    _

</llo_original>
